<compile_context>
chip_gen: v7x
topology: tpu7x:2x2x1
jax: 0.10.0
libtpu: 0.0.40
codegen_flags: <defaults>
</compile_context>

<pallas_src>
import functools

import jax
import jax.numpy as jnp
from jax.experimental import pallas as pl
from jax.experimental.pallas import tpu as pltpu

# ---- module hyperparameters (small, consistent with the reference block) ----
EMBED_DIM = 32          # embed_dim
NUM_HEADS = 4           # num_heads
MLP_DIM = 64            # mlp_dim
LN_EPS = 1e-5
_INV_SQRT2 = 0.7071067811865476


def _gelu_exact(x):
    # nn.GELU default = exact erf formulation
    return 0.5 * x * (1.0 + jax.lax.erf(x * _INV_SQRT2))


def _normalize(x):
    # LayerNorm core (biased variance over the last dim), affine folded away
    mu = jnp.mean(x, axis=-1, keepdims=True)
    var = jnp.mean(jnp.square(x - mu), axis=-1, keepdims=True)
    return (x - mu) * jax.lax.rsqrt(var + LN_EPS)


def _layer_norm(x, w, b):
    # full nn.LayerNorm (used only by the pure-JAX reference)
    return _normalize(x) * w + b


# ----------------------------------------------------------------------------
# Fused transformer-encoder-block kernel (single pallas_call, no grid)
# ----------------------------------------------------------------------------
def transformer_encoder_kernel(x_ref, w_in_ref, w_fc2_ref, vecs_ref, o_ref, *,
                               batch, seq, num_heads):
    x = x_ref[...]                                    # (B*N, C) float32
    BN, C = x.shape
    hd = C // num_heads
    C3 = 3 * C

    # packed weight slabs (static lane slices of resident VMEM arrays)
    w_in = w_in_ref[...]                              # (C, 3C + C + MLP)
    w_qkv = w_in[:, :C3]                              # (C, 3C)  LN1 + scale folded in
    w_proj = w_in[:, C3:C3 + C]                       # (C, C)
    w_fc1 = w_in[:, C3 + C:]                          # (C, MLP) LN2 folded in
    mlp_dim = w_fc1.shape[1]
    w_fc2 = w_fc2_ref[...]                            # (MLP, C)

    vecs = vecs_ref[...]                              # (8, 128) packed bias rows
    b_qkv = vecs[0:1, :C3]                            # LN1 bias folded in
    b_proj = vecs[1:2, :C]
    b_fc1 = vecs[2:3, :mlp_dim]                       # LN2 bias folded in
    b_fc2 = vecs[3:4, :C]

    # ---- LayerNorm 1 (pure normalize; affine folded) + QKV projection ----
    xn = _normalize(x)
    qkv = jnp.dot(xn, w_qkv, preferred_element_type=jnp.float32) + b_qkv   # (BN, 3C)
    qkv = qkv.reshape(batch, seq, C3)                 # leading-dim split: layout no-op

    # ---- multi-head self-attention; heads accumulated into the projection ----
    attn_acc = jnp.zeros((BN, C), jnp.float32)
    for h in range(num_heads):                        # static unroll; einsums batch over B
        qh = qkv[:, :, h * hd:(h + 1) * hd]           # (B, N, hd) (pre-scaled)
        kh = qkv[:, :, C + h * hd:C + (h + 1) * hd]
        vh = qkv[:, :, 2 * C + h * hd:2 * C + (h + 1) * hd]
        s = jnp.einsum('bqd,bkd->bqk', qh, kh,
                       preferred_element_type=jnp.float32)                 # (B, N, N)
        s = s - jnp.max(s, axis=-1, keepdims=True)
        e = jnp.exp(s)
        p = e * pl.reciprocal(jnp.sum(e, axis=-1, keepdims=True), approx=True)
        ctx = jnp.einsum('bqk,bkd->bqd', p, vh,
                         preferred_element_type=jnp.float32)               # (B, N, hd)
        # accumulate head output directly into the output projection (no concat)
        attn_acc = attn_acc + jnp.dot(ctx.reshape(BN, hd),
                                      w_proj[h * hd:(h + 1) * hd, :],
                                      preferred_element_type=jnp.float32)
    x1 = x + attn_acc + b_proj                        # residual 1

    # ---- LayerNorm 2 (pure normalize) + GELU MLP + residual 2 ----
    x2n = _normalize(x1)
    h1 = _gelu_exact(jnp.dot(x2n, w_fc1, preferred_element_type=jnp.float32) + b_fc1)
    o_ref[...] = x1 + jnp.dot(h1, w_fc2, preferred_element_type=jnp.float32) + b_fc2


# ----------------------------------------------------------------------------
# Wrapper
# ----------------------------------------------------------------------------
def transformer_encoder(x, packed, *, num_heads=NUM_HEADS):
    B, N, C = x.shape
    x2 = x.reshape(B * N, C)                          # wrapper-side reshape: free
    kernel = functools.partial(transformer_encoder_kernel,
                               batch=B, seq=N, num_heads=num_heads)
    vmem = pl.BlockSpec(memory_space=pltpu.MemorySpace.VMEM)   # whole array, VMEM-resident
    out = pl.pallas_call(
        kernel,
        out_shape=jax.ShapeDtypeStruct((B * N, C), jnp.float32),
        in_specs=[vmem, vmem, vmem, vmem],
        out_specs=vmem,
    )(x2, packed['w_in'], packed['w_fc2'], packed['vecs'])
    return out.reshape(B, N, C)


# ----------------------------------------------------------------------------
# Deterministic parameter construction + build-time packing / folding
# ----------------------------------------------------------------------------
def _init_linear(key, fan_in, fan_out):
    kw, kb = jax.random.split(key)
    w = jax.random.normal(kw, (fan_in, fan_out), jnp.float32) * 0.02   # (in, out) layout
    b = jax.random.normal(kb, (fan_out,), jnp.float32) * 0.01
    return w, b


def init_raw_params(key, embed_dim=EMBED_DIM, mlp_dim=MLP_DIM):
    k1, k2, k3, k4, k5 = jax.random.split(key, 5)
    qkv_w, qkv_b = _init_linear(k1, embed_dim, 3 * embed_dim)
    proj_w, proj_b = _init_linear(k2, embed_dim, embed_dim)
    fc1_w, fc1_b = _init_linear(k3, embed_dim, mlp_dim)
    fc2_w, fc2_b = _init_linear(k4, mlp_dim, embed_dim)
    # non-trivial LN affines so the build-time folding is actually exercised
    g1, g2, g3, g4 = jax.random.split(k5, 4)
    return dict(
        ln1_w=1.0 + 0.1 * jax.random.normal(g1, (embed_dim,), jnp.float32),
        ln1_b=0.05 * jax.random.normal(g2, (embed_dim,), jnp.float32),
        ln2_w=1.0 + 0.1 * jax.random.normal(g3, (embed_dim,), jnp.float32),
        ln2_b=0.05 * jax.random.normal(g4, (embed_dim,), jnp.float32),
        qkv_w=qkv_w, qkv_b=qkv_b, proj_w=proj_w, proj_b=proj_b,
        fc1_w=fc1_w, fc1_b=fc1_b, fc2_w=fc2_w, fc2_b=fc2_b,
    )


def pack_params(raw, num_heads=NUM_HEADS):
    C = raw['qkv_w'].shape[0]
    hd = C // num_heads
    scale = hd ** -0.5

    # fold the attention scale into the Q slice of the QKV weights/bias
    qkv_w = raw['qkv_w'].at[:, :C].multiply(scale)
    qkv_b = raw['qkv_b'].at[:C].multiply(scale)

    # fold LN1 affine into QKV:  LN1(x) @ W + b == norm(x) @ (diag(w1) W) + (b1 @ W + b)
    qkv_w_f = qkv_w * raw['ln1_w'][:, None]
    qkv_b_f = raw['ln1_b'] @ qkv_w + qkv_b

    # fold LN2 affine into fc1
    fc1_w_f = raw['fc1_w'] * raw['ln2_w'][:, None]
    fc1_b_f = raw['ln2_b'] @ raw['fc1_w'] + raw['fc1_b']

    # one lane-dense weight slab for everything with fan_in == C
    w_in = jnp.concatenate([qkv_w_f, raw['proj_w'], fc1_w_f], axis=1)   # (C, 3C+C+MLP)

    def row(v):
        assert v.shape[0] <= 128
        return jnp.pad(v, (0, 128 - v.shape[0]))[None, :]

    # one (8, 128) slab (exactly one f32 vreg tile) holding all bias vectors
    vecs = jnp.concatenate([row(qkv_b_f), row(raw['proj_b']),
                            row(fc1_b_f), row(raw['fc2_b'])], axis=0)
    vecs = jnp.pad(vecs, ((0, 4), (0, 0)))            # pad rows 4..7 with zeros
    return dict(w_in=w_in, w_fc2=raw['fc2_w'], vecs=vecs)


# ----------------------------------------------------------------------------
# Pure-JAX reference mirroring the PyTorch forward (for a sanity check)
# ----------------------------------------------------------------------------
def reference_forward(x, r, num_heads=NUM_HEADS):
    B, N, C = x.shape
    hd = C // num_heads
    xn = _layer_norm(x, r['ln1_w'], r['ln1_b'])
    qkv = xn @ r['qkv_w'] + r['qkv_b']
    qkv = jnp.transpose(qkv.reshape(B, N, 3, num_heads, hd), (2, 0, 3, 1, 4))
    q, k, v = qkv[0], qkv[1], qkv[2]                  # (B, H, N, hd)
    attn = (q @ jnp.swapaxes(k, -2, -1)) * (hd ** -0.5)
    attn = jax.nn.softmax(attn, axis=-1)
    ctx = jnp.transpose(attn @ v, (0, 2, 1, 3)).reshape(B, N, C)
    x = x + ctx @ r['proj_w'] + r['proj_b']
    x2n = _layer_norm(x, r['ln2_w'], r['ln2_b'])
    return x + _gelu_exact(x2n @ r['fc1_w'] + r['fc1_b']) @ r['fc2_w'] + r['fc2_b']


if __name__ == "__main__":
    key = jax.random.PRNGKey(0)
    kp, kx = jax.random.split(key)

    B, N = 2, 8
    raw = init_raw_params(kp)
    packed = pack_params(raw)
    x = jax.random.normal(kx, (B, N, EMBED_DIM), jnp.float32)

    out = transformer_encoder(x, packed)
    jax.block_until_ready(out)

    ref = reference_forward(x, raw)
    err = float(jnp.max(jnp.abs(out - ref)))

    assert out.shape == (B, N, EMBED_DIM)
    assert out.dtype == jnp.float32
    assert err < 5e-3, f"max abs error vs reference: {err}"
    print("KERNEL_OK")
</pallas_src>

<mosaic_0001>
module attributes {stable_mosaic.version = 11 : i64} {
  func.func @transformer_encoder_kernel(%arg0: memref<16x32xf32, #tpu.memory_space<vmem>>, %arg1: memref<32x192xf32, #tpu.memory_space<vmem>>, %arg2: memref<64x32xf32, #tpu.memory_space<vmem>>, %arg3: memref<8x128xf32, #tpu.memory_space<vmem>>, %arg4: memref<16x32xf32, #tpu.memory_space<vmem>>) attributes {dimension_semantics = [], scalar_prefetch = 0 : i64, scratch_operands = 0 : i64, tpu.core_type = #tpu.core_type<tc>} {
    %c0 = arith.constant 0 : index
    %c0_0 = arith.constant 0 : index
    %0 = vector.load %arg0[%c0, %c0_0] : memref<16x32xf32, #tpu.memory_space<vmem>>, vector<16x32xf32>
    %c0_1 = arith.constant 0 : index
    %c0_2 = arith.constant 0 : index
    %1 = vector.load %arg1[%c0_1, %c0_2] : memref<32x192xf32, #tpu.memory_space<vmem>>, vector<32x192xf32>
    %2 = vector.extract_strided_slice %1 {offsets = [0, 0], sizes = [32, 96], strides = [1, 1]} : vector<32x192xf32> to vector<32x96xf32>
    %3 = vector.extract_strided_slice %1 {offsets = [0, 96], sizes = [32, 32], strides = [1, 1]} : vector<32x192xf32> to vector<32x32xf32>
    %4 = vector.extract_strided_slice %1 {offsets = [0, 128], sizes = [32, 64], strides = [1, 1]} : vector<32x192xf32> to vector<32x64xf32>
    %c0_3 = arith.constant 0 : index
    %c0_4 = arith.constant 0 : index
    %5 = vector.load %arg2[%c0_3, %c0_4] : memref<64x32xf32, #tpu.memory_space<vmem>>, vector<64x32xf32>
    %c0_5 = arith.constant 0 : index
    %c0_6 = arith.constant 0 : index
    %6 = vector.load %arg3[%c0_5, %c0_6] : memref<8x128xf32, #tpu.memory_space<vmem>>, vector<8x128xf32>
    %7 = vector.extract_strided_slice %6 {offsets = [0, 0], sizes = [1, 96], strides = [1, 1]} : vector<8x128xf32> to vector<1x96xf32>
    %8 = vector.extract_strided_slice %6 {offsets = [1, 0], sizes = [1, 32], strides = [1, 1]} : vector<8x128xf32> to vector<1x32xf32>
    %9 = vector.extract_strided_slice %6 {offsets = [2, 0], sizes = [1, 64], strides = [1, 1]} : vector<8x128xf32> to vector<1x64xf32>
    %10 = vector.extract_strided_slice %6 {offsets = [3, 0], sizes = [1, 32], strides = [1, 1]} : vector<8x128xf32> to vector<1x32xf32>
    %cst = arith.constant dense<0.000000e+00> : vector<16xf32>
    %11 = vector.multi_reduction <add>, %0, %cst [1] : vector<16x32xf32> to vector<16xf32>
    %12 = vector.shape_cast %11 : vector<16xf32> to vector<16x1xf32>
    %cst_7 = arith.constant 3.200000e+01 : f32
    %13 = vector.broadcast %cst_7 : f32 to vector<16x1xf32>
    %14 = arith.divf %12, %13 : vector<16x1xf32>
    %15 = vector.broadcast %14 : vector<16x1xf32> to vector<16x32xf32>
    %16 = arith.subf %0, %15 : vector<16x32xf32>
    %17 = arith.mulf %16, %16 : vector<16x32xf32>
    %cst_8 = arith.constant dense<0.000000e+00> : vector<16xf32>
    %18 = vector.multi_reduction <add>, %17, %cst_8 [1] : vector<16x32xf32> to vector<16xf32>
    %19 = vector.shape_cast %18 : vector<16xf32> to vector<16x1xf32>
    %cst_9 = arith.constant 3.200000e+01 : f32
    %20 = vector.broadcast %cst_9 : f32 to vector<16x1xf32>
    %21 = arith.divf %19, %20 : vector<16x1xf32>
    %22 = vector.broadcast %14 : vector<16x1xf32> to vector<16x32xf32>
    %23 = arith.subf %0, %22 : vector<16x32xf32>
    %cst_10 = arith.constant 9.99999974E-6 : f32
    %24 = vector.broadcast %cst_10 : f32 to vector<16x1xf32>
    %25 = arith.addf %21, %24 : vector<16x1xf32>
    %26 = math.rsqrt %25 : vector<16x1xf32>
    %27 = vector.broadcast %26 : vector<16x1xf32> to vector<16x32xf32>
    %28 = arith.mulf %23, %27 : vector<16x32xf32>
    %cst_11 = arith.constant dense<0.000000e+00> : vector<16x96xf32>
    %29 = tpu.matmul %28, %2, %cst_11 {dimension_numbers = #tpu.dot_dimension_numbers<[1], [0], [0], [1], [0, 0, 1, 1], [], []>} : vector<16x32xf32>, vector<32x96xf32>, vector<16x96xf32> -> vector<16x96xf32>
    %30 = vector.broadcast %7 : vector<1x96xf32> to vector<16x96xf32>
    %31 = arith.addf %29, %30 : vector<16x96xf32>
    %32 = vector.shape_cast %31 : vector<16x96xf32> to vector<2x8x96xf32>
    %cst_12 = arith.constant 0.000000e+00 : f32
    %33 = vector.broadcast %cst_12 : f32 to vector<16x32xf32>
    %34 = vector.extract_strided_slice %32 {offsets = [0, 0, 0], sizes = [2, 8, 8], strides = [1, 1, 1]} : vector<2x8x96xf32> to vector<2x8x8xf32>
    %35 = vector.extract_strided_slice %32 {offsets = [0, 0, 32], sizes = [2, 8, 8], strides = [1, 1, 1]} : vector<2x8x96xf32> to vector<2x8x8xf32>
    %36 = vector.extract_strided_slice %32 {offsets = [0, 0, 64], sizes = [2, 8, 8], strides = [1, 1, 1]} : vector<2x8x96xf32> to vector<2x8x8xf32>
    "tpu.trace_start"() <{level = 10 : i32, message = "bqd,bkd->bqk"}> : () -> ()
    %cst_13 = arith.constant dense<0.000000e+00> : vector<2x8x8xf32>
    %37 = tpu.matmul %34, %35, %cst_13 {dimension_numbers = #tpu.dot_dimension_numbers<[2], [2], [1], [1], [0, 0, 0, 1, 1, 1], [0], [0]>} : vector<2x8x8xf32>, vector<2x8x8xf32>, vector<2x8x8xf32> -> vector<2x8x8xf32>
    "tpu.trace_stop"() : () -> ()
    %cst_14 = arith.constant dense<0xFF800000> : vector<2x8xf32>
    %38 = vector.multi_reduction <maximumf>, %37, %cst_14 [2] : vector<2x8x8xf32> to vector<2x8xf32>
    %39 = vector.shape_cast %38 : vector<2x8xf32> to vector<2x8x1xf32>
    %40 = vector.broadcast %39 : vector<2x8x1xf32> to vector<2x8x8xf32>
    %41 = arith.subf %37, %40 : vector<2x8x8xf32>
    %42 = math.exp %41 : vector<2x8x8xf32>
    %cst_15 = arith.constant dense<0.000000e+00> : vector<2x8xf32>
    %43 = vector.multi_reduction <add>, %42, %cst_15 [2] : vector<2x8x8xf32> to vector<2x8xf32>
    %44 = vector.shape_cast %43 : vector<2x8xf32> to vector<2x8x1xf32>
    %45 = tpu.reciprocal %44 {approx = true} : vector<2x8x1xf32> -> vector<2x8x1xf32>
    %46 = vector.broadcast %45 : vector<2x8x1xf32> to vector<2x8x8xf32>
    %47 = arith.mulf %42, %46 : vector<2x8x8xf32>
    "tpu.trace_start"() <{level = 10 : i32, message = "bqk,bkd->bqd"}> : () -> ()
    %cst_16 = arith.constant dense<0.000000e+00> : vector<2x8x8xf32>
    %48 = tpu.matmul %47, %36, %cst_16 {dimension_numbers = #tpu.dot_dimension_numbers<[2], [1], [1], [2], [0, 0, 0, 1, 1, 2], [0], [0]>} : vector<2x8x8xf32>, vector<2x8x8xf32>, vector<2x8x8xf32> -> vector<2x8x8xf32>
    "tpu.trace_stop"() : () -> ()
    %49 = vector.shape_cast %48 : vector<2x8x8xf32> to vector<16x8xf32>
    %50 = vector.extract_strided_slice %3 {offsets = [0, 0], sizes = [8, 32], strides = [1, 1]} : vector<32x32xf32> to vector<8x32xf32>
    %cst_17 = arith.constant dense<0.000000e+00> : vector<16x32xf32>
    %51 = tpu.matmul %49, %50, %cst_17 {dimension_numbers = #tpu.dot_dimension_numbers<[1], [0], [0], [1], [0, 0, 1, 1], [], []>} : vector<16x8xf32>, vector<8x32xf32>, vector<16x32xf32> -> vector<16x32xf32>
    %52 = arith.addf %33, %51 : vector<16x32xf32>
    %53 = vector.extract_strided_slice %32 {offsets = [0, 0, 8], sizes = [2, 8, 8], strides = [1, 1, 1]} : vector<2x8x96xf32> to vector<2x8x8xf32>
    %54 = vector.extract_strided_slice %32 {offsets = [0, 0, 40], sizes = [2, 8, 8], strides = [1, 1, 1]} : vector<2x8x96xf32> to vector<2x8x8xf32>
    %55 = vector.extract_strided_slice %32 {offsets = [0, 0, 72], sizes = [2, 8, 8], strides = [1, 1, 1]} : vector<2x8x96xf32> to vector<2x8x8xf32>
    "tpu.trace_start"() <{level = 10 : i32, message = "bqd,bkd->bqk"}> : () -> ()
    %cst_18 = arith.constant dense<0.000000e+00> : vector<2x8x8xf32>
    %56 = tpu.matmul %53, %54, %cst_18 {dimension_numbers = #tpu.dot_dimension_numbers<[2], [2], [1], [1], [0, 0, 0, 1, 1, 1], [0], [0]>} : vector<2x8x8xf32>, vector<2x8x8xf32>, vector<2x8x8xf32> -> vector<2x8x8xf32>
    "tpu.trace_stop"() : () -> ()
    %cst_19 = arith.constant dense<0xFF800000> : vector<2x8xf32>
    %57 = vector.multi_reduction <maximumf>, %56, %cst_19 [2] : vector<2x8x8xf32> to vector<2x8xf32>
    %58 = vector.shape_cast %57 : vector<2x8xf32> to vector<2x8x1xf32>
    %59 = vector.broadcast %58 : vector<2x8x1xf32> to vector<2x8x8xf32>
    %60 = arith.subf %56, %59 : vector<2x8x8xf32>
    %61 = math.exp %60 : vector<2x8x8xf32>
    %cst_20 = arith.constant dense<0.000000e+00> : vector<2x8xf32>
    %62 = vector.multi_reduction <add>, %61, %cst_20 [2] : vector<2x8x8xf32> to vector<2x8xf32>
    %63 = vector.shape_cast %62 : vector<2x8xf32> to vector<2x8x1xf32>
    %64 = tpu.reciprocal %63 {approx = true} : vector<2x8x1xf32> -> vector<2x8x1xf32>
    %65 = vector.broadcast %64 : vector<2x8x1xf32> to vector<2x8x8xf32>
    %66 = arith.mulf %61, %65 : vector<2x8x8xf32>
    "tpu.trace_start"() <{level = 10 : i32, message = "bqk,bkd->bqd"}> : () -> ()
    %cst_21 = arith.constant dense<0.000000e+00> : vector<2x8x8xf32>
    %67 = tpu.matmul %66, %55, %cst_21 {dimension_numbers = #tpu.dot_dimension_numbers<[2], [1], [1], [2], [0, 0, 0, 1, 1, 2], [0], [0]>} : vector<2x8x8xf32>, vector<2x8x8xf32>, vector<2x8x8xf32> -> vector<2x8x8xf32>
    "tpu.trace_stop"() : () -> ()
    %68 = vector.shape_cast %67 : vector<2x8x8xf32> to vector<16x8xf32>
    %69 = vector.extract_strided_slice %3 {offsets = [8, 0], sizes = [8, 32], strides = [1, 1]} : vector<32x32xf32> to vector<8x32xf32>
    %cst_22 = arith.constant dense<0.000000e+00> : vector<16x32xf32>
    %70 = tpu.matmul %68, %69, %cst_22 {dimension_numbers = #tpu.dot_dimension_numbers<[1], [0], [0], [1], [0, 0, 1, 1], [], []>} : vector<16x8xf32>, vector<8x32xf32>, vector<16x32xf32> -> vector<16x32xf32>
    %71 = arith.addf %52, %70 : vector<16x32xf32>
    %72 = vector.extract_strided_slice %32 {offsets = [0, 0, 16], sizes = [2, 8, 8], strides = [1, 1, 1]} : vector<2x8x96xf32> to vector<2x8x8xf32>
    %73 = vector.extract_strided_slice %32 {offsets = [0, 0, 48], sizes = [2, 8, 8], strides = [1, 1, 1]} : vector<2x8x96xf32> to vector<2x8x8xf32>
    %74 = vector.extract_strided_slice %32 {offsets = [0, 0, 80], sizes = [2, 8, 8], strides = [1, 1, 1]} : vector<2x8x96xf32> to vector<2x8x8xf32>
    "tpu.trace_start"() <{level = 10 : i32, message = "bqd,bkd->bqk"}> : () -> ()
    %cst_23 = arith.constant dense<0.000000e+00> : vector<2x8x8xf32>
    %75 = tpu.matmul %72, %73, %cst_23 {dimension_numbers = #tpu.dot_dimension_numbers<[2], [2], [1], [1], [0, 0, 0, 1, 1, 1], [0], [0]>} : vector<2x8x8xf32>, vector<2x8x8xf32>, vector<2x8x8xf32> -> vector<2x8x8xf32>
    "tpu.trace_stop"() : () -> ()
    %cst_24 = arith.constant dense<0xFF800000> : vector<2x8xf32>
    %76 = vector.multi_reduction <maximumf>, %75, %cst_24 [2] : vector<2x8x8xf32> to vector<2x8xf32>
    %77 = vector.shape_cast %76 : vector<2x8xf32> to vector<2x8x1xf32>
    %78 = vector.broadcast %77 : vector<2x8x1xf32> to vector<2x8x8xf32>
    %79 = arith.subf %75, %78 : vector<2x8x8xf32>
    %80 = math.exp %79 : vector<2x8x8xf32>
    %cst_25 = arith.constant dense<0.000000e+00> : vector<2x8xf32>
    %81 = vector.multi_reduction <add>, %80, %cst_25 [2] : vector<2x8x8xf32> to vector<2x8xf32>
    %82 = vector.shape_cast %81 : vector<2x8xf32> to vector<2x8x1xf32>
    %83 = tpu.reciprocal %82 {approx = true} : vector<2x8x1xf32> -> vector<2x8x1xf32>
    %84 = vector.broadcast %83 : vector<2x8x1xf32> to vector<2x8x8xf32>
    %85 = arith.mulf %80, %84 : vector<2x8x8xf32>
    "tpu.trace_start"() <{level = 10 : i32, message = "bqk,bkd->bqd"}> : () -> ()
    %cst_26 = arith.constant dense<0.000000e+00> : vector<2x8x8xf32>
    %86 = tpu.matmul %85, %74, %cst_26 {dimension_numbers = #tpu.dot_dimension_numbers<[2], [1], [1], [2], [0, 0, 0, 1, 1, 2], [0], [0]>} : vector<2x8x8xf32>, vector<2x8x8xf32>, vector<2x8x8xf32> -> vector<2x8x8xf32>
    "tpu.trace_stop"() : () -> ()
    %87 = vector.shape_cast %86 : vector<2x8x8xf32> to vector<16x8xf32>
    %88 = vector.extract_strided_slice %3 {offsets = [16, 0], sizes = [8, 32], strides = [1, 1]} : vector<32x32xf32> to vector<8x32xf32>
    %cst_27 = arith.constant dense<0.000000e+00> : vector<16x32xf32>
    %89 = tpu.matmul %87, %88, %cst_27 {dimension_numbers = #tpu.dot_dimension_numbers<[1], [0], [0], [1], [0, 0, 1, 1], [], []>} : vector<16x8xf32>, vector<8x32xf32>, vector<16x32xf32> -> vector<16x32xf32>
    %90 = arith.addf %71, %89 : vector<16x32xf32>
    %91 = vector.extract_strided_slice %32 {offsets = [0, 0, 24], sizes = [2, 8, 8], strides = [1, 1, 1]} : vector<2x8x96xf32> to vector<2x8x8xf32>
    %92 = vector.extract_strided_slice %32 {offsets = [0, 0, 56], sizes = [2, 8, 8], strides = [1, 1, 1]} : vector<2x8x96xf32> to vector<2x8x8xf32>
    %93 = vector.extract_strided_slice %32 {offsets = [0, 0, 88], sizes = [2, 8, 8], strides = [1, 1, 1]} : vector<2x8x96xf32> to vector<2x8x8xf32>
    "tpu.trace_start"() <{level = 10 : i32, message = "bqd,bkd->bqk"}> : () -> ()
    %cst_28 = arith.constant dense<0.000000e+00> : vector<2x8x8xf32>
    %94 = tpu.matmul %91, %92, %cst_28 {dimension_numbers = #tpu.dot_dimension_numbers<[2], [2], [1], [1], [0, 0, 0, 1, 1, 1], [0], [0]>} : vector<2x8x8xf32>, vector<2x8x8xf32>, vector<2x8x8xf32> -> vector<2x8x8xf32>
    "tpu.trace_stop"() : () -> ()
    %cst_29 = arith.constant dense<0xFF800000> : vector<2x8xf32>
    %95 = vector.multi_reduction <maximumf>, %94, %cst_29 [2] : vector<2x8x8xf32> to vector<2x8xf32>
    %96 = vector.shape_cast %95 : vector<2x8xf32> to vector<2x8x1xf32>
    %97 = vector.broadcast %96 : vector<2x8x1xf32> to vector<2x8x8xf32>
    %98 = arith.subf %94, %97 : vector<2x8x8xf32>
    %99 = math.exp %98 : vector<2x8x8xf32>
    %cst_30 = arith.constant dense<0.000000e+00> : vector<2x8xf32>
    %100 = vector.multi_reduction <add>, %99, %cst_30 [2] : vector<2x8x8xf32> to vector<2x8xf32>
    %101 = vector.shape_cast %100 : vector<2x8xf32> to vector<2x8x1xf32>
    %102 = tpu.reciprocal %101 {approx = true} : vector<2x8x1xf32> -> vector<2x8x1xf32>
    %103 = vector.broadcast %102 : vector<2x8x1xf32> to vector<2x8x8xf32>
    %104 = arith.mulf %99, %103 : vector<2x8x8xf32>
    "tpu.trace_start"() <{level = 10 : i32, message = "bqk,bkd->bqd"}> : () -> ()
    %cst_31 = arith.constant dense<0.000000e+00> : vector<2x8x8xf32>
    %105 = tpu.matmul %104, %93, %cst_31 {dimension_numbers = #tpu.dot_dimension_numbers<[2], [1], [1], [2], [0, 0, 0, 1, 1, 2], [0], [0]>} : vector<2x8x8xf32>, vector<2x8x8xf32>, vector<2x8x8xf32> -> vector<2x8x8xf32>
    "tpu.trace_stop"() : () -> ()
    %106 = vector.shape_cast %105 : vector<2x8x8xf32> to vector<16x8xf32>
    %107 = vector.extract_strided_slice %3 {offsets = [24, 0], sizes = [8, 32], strides = [1, 1]} : vector<32x32xf32> to vector<8x32xf32>
    %cst_32 = arith.constant dense<0.000000e+00> : vector<16x32xf32>
    %108 = tpu.matmul %106, %107, %cst_32 {dimension_numbers = #tpu.dot_dimension_numbers<[1], [0], [0], [1], [0, 0, 1, 1], [], []>} : vector<16x8xf32>, vector<8x32xf32>, vector<16x32xf32> -> vector<16x32xf32>
    %109 = arith.addf %90, %108 : vector<16x32xf32>
    %110 = arith.addf %0, %109 : vector<16x32xf32>
    %111 = vector.broadcast %8 : vector<1x32xf32> to vector<16x32xf32>
    %112 = arith.addf %110, %111 : vector<16x32xf32>
    %cst_33 = arith.constant dense<0.000000e+00> : vector<16xf32>
    %113 = vector.multi_reduction <add>, %112, %cst_33 [1] : vector<16x32xf32> to vector<16xf32>
    %114 = vector.shape_cast %113 : vector<16xf32> to vector<16x1xf32>
    %cst_34 = arith.constant 3.200000e+01 : f32
    %115 = vector.broadcast %cst_34 : f32 to vector<16x1xf32>
    %116 = arith.divf %114, %115 : vector<16x1xf32>
    %117 = vector.broadcast %116 : vector<16x1xf32> to vector<16x32xf32>
    %118 = arith.subf %112, %117 : vector<16x32xf32>
    %119 = arith.mulf %118, %118 : vector<16x32xf32>
    %cst_35 = arith.constant dense<0.000000e+00> : vector<16xf32>
    %120 = vector.multi_reduction <add>, %119, %cst_35 [1] : vector<16x32xf32> to vector<16xf32>
    %121 = vector.shape_cast %120 : vector<16xf32> to vector<16x1xf32>
    %cst_36 = arith.constant 3.200000e+01 : f32
    %122 = vector.broadcast %cst_36 : f32 to vector<16x1xf32>
    %123 = arith.divf %121, %122 : vector<16x1xf32>
    %124 = vector.broadcast %116 : vector<16x1xf32> to vector<16x32xf32>
    %125 = arith.subf %112, %124 : vector<16x32xf32>
    %cst_37 = arith.constant 9.99999974E-6 : f32
    %126 = vector.broadcast %cst_37 : f32 to vector<16x1xf32>
    %127 = arith.addf %123, %126 : vector<16x1xf32>
    %128 = math.rsqrt %127 : vector<16x1xf32>
    %129 = vector.broadcast %128 : vector<16x1xf32> to vector<16x32xf32>
    %130 = arith.mulf %125, %129 : vector<16x32xf32>
    %cst_38 = arith.constant dense<0.000000e+00> : vector<16x64xf32>
    %131 = tpu.matmul %130, %4, %cst_38 {dimension_numbers = #tpu.dot_dimension_numbers<[1], [0], [0], [1], [0, 0, 1, 1], [], []>} : vector<16x32xf32>, vector<32x64xf32>, vector<16x64xf32> -> vector<16x64xf32>
    %132 = vector.broadcast %9 : vector<1x64xf32> to vector<16x64xf32>
    %133 = arith.addf %131, %132 : vector<16x64xf32>
    %cst_39 = arith.constant 5.000000e-01 : f32
    %134 = vector.broadcast %cst_39 : f32 to vector<16x64xf32>
    %135 = arith.mulf %134, %133 : vector<16x64xf32>
    %cst_40 = arith.constant 0.707106769 : f32
    %136 = vector.broadcast %cst_40 : f32 to vector<16x64xf32>
    %137 = arith.mulf %133, %136 : vector<16x64xf32>
    %138 = math.erf %137 : vector<16x64xf32>
    %cst_41 = arith.constant 1.000000e+00 : f32
    %139 = vector.broadcast %cst_41 : f32 to vector<16x64xf32>
    %140 = arith.addf %139, %138 : vector<16x64xf32>
    %141 = arith.mulf %135, %140 : vector<16x64xf32>
    %cst_42 = arith.constant dense<0.000000e+00> : vector<16x32xf32>
    %142 = tpu.matmul %141, %5, %cst_42 {dimension_numbers = #tpu.dot_dimension_numbers<[1], [0], [0], [1], [0, 0, 1, 1], [], []>} : vector<16x64xf32>, vector<64x32xf32>, vector<16x32xf32> -> vector<16x32xf32>
    %143 = arith.addf %112, %142 : vector<16x32xf32>
    %144 = vector.broadcast %10 : vector<1x32xf32> to vector<16x32xf32>
    %145 = arith.addf %143, %144 : vector<16x32xf32>
    %c0_43 = arith.constant 0 : index
    %c0_44 = arith.constant 0 : index
    %146 = vector.load %arg4[%c0_43, %c0_44] : memref<16x32xf32, #tpu.memory_space<vmem>>, vector<16x32xf32>
    tpu.vector_store %arg4[%c0_43, %c0_44], %145 {strides = array<i32>} : memref<16x32xf32, #tpu.memory_space<vmem>>, vector<16x32xf32>,
    return
  }
}

</mosaic_0001>

<llo_original>
// kernel: tpu_custom_call.1
$region0: #{tpu_custom_call.1}
  #allocation0 [shape = 'u32[]', space=smem, size = 0x4, offset = 0x4, fixed_abs, tag = 'smem constant byte address 0x4 - core index']
  #allocation1 [shape = 'u32[144,128]{1,0:T(1,128)}', space=vmem, size = 0x12000, scoped, tag = 'internal scratch']
  %s0 = inlined_call_operand.vmem [shape: f32[16,32], index: 0, kind: input, shape index: {}]
  %s1 = inlined_call_operand.vmem [shape: f32[32,192], index: 1, kind: input, shape index: {}]
  %s2 = inlined_call_operand.vmem [shape: f32[64,32], index: 2, kind: input, shape index: {}]
  %s3 = inlined_call_operand.vmem [shape: f32[8,128], index: 3, kind: input, shape index: {}]
  %s4 = inlined_call_operand.hbm [shape: f32[16,32], index: 4, kind: output, shape index: {}]
  %s5 = sld [smem:[#allocation0]]
  $region26: #{tpu_custom_call.1} parent=0
    _
  %s7 = ssub.s32 1, %s5
  %s8 = scalar_select 0, %s7, %s5
  $region1: #{tpu_custom_call.1} parent=0
    #allocation2 [shape = 'u8[8192]{0}', space=vmem, size = 0x2000, scoped, tag = 'output window, operand 0, single buffered']
    #allocation3 [shape = 's32[1]{0}', space=sflag, size = 0x4, scoped, tag = 'scoped memory for tpu_custom_call.1']
    %9 = vsyncpa [#allocation3], 0
    // Predicated region
    $region2: #{tpu_custom_call.1} parent=1 // pred_check
      _
    $region3: #{tpu_custom_call.1} parent=1 // pred_check_branch
      %11 = sbr.rel (0) target = $region5
    $region4: #{tpu_custom_call.1} parent=1 // pred_region
      _
    $region5: #{tpu_custom_call.1} parent=1 // pred_fallthru
      _
    // Predicated region
    $region6: #{tpu_custom_call.1} parent=1 // pred_check
      _
    $region7: #{tpu_custom_call.1} parent=1 // pred_check_branch
      %13 = sbr.rel (0) target = $region9
    $region8: #{tpu_custom_call.1} parent=1 // pred_region
      _
    $region9: #{tpu_custom_call.1} parent=1 // pred_fallthru
      _
    // Predicated region
    $region10: #{tpu_custom_call.1} parent=1 // pred_check
      _
    $region11: #{tpu_custom_call.1} parent=1 // pred_check_branch
      %15 = sbr.rel (0) target = $region13
    $region12: #{tpu_custom_call.1} parent=1 // pred_region
      _
    $region13: #{tpu_custom_call.1} parent=1 // pred_fallthru
      _
    // Predicated region
    $region14: #{tpu_custom_call.1} parent=1 // pred_check
      _
    $region15: #{tpu_custom_call.1} parent=1 // pred_check_branch
      %17 = sbr.rel (0) target = $region17
    $region16: #{tpu_custom_call.1} parent=1 // pred_region
      _
    $region17: #{tpu_custom_call.1} parent=1 // pred_fallthru
      _
    %v18 = vld [vmem:[%s0] sm:$0xff]
    %v19 = vld [vmem:[%s0 + $0x8] sm:$0xff]
    %v20 = vld [vmem:[%s1] sm:$0xff]
    %v21 = vld [vmem:[%s1 + $0x8] sm:$0xff]
    %v22 = vld [vmem:[%s1 + $0x10] sm:$0xff]
    %v23 = vld [vmem:[%s1 + $0x18] sm:$0xff]
    %v24 = vld [vmem:[%s1 + $0x20] sm:$0xff]
    %v25 = vld [vmem:[%s1 + $0x28] sm:$0xff]
    %v26 = vld [vmem:[%s1 + $0x30] sm:$0xff]
    %v27 = vld [vmem:[%s1 + $0x38] sm:$0xff]
    %v28 = vld [vmem:[%s2] sm:$0xff]
    %v29 = vld [vmem:[%s2 + $0x8] sm:$0xff]
    %v30 = vld [vmem:[%s2 + $0x10] sm:$0xff]
    %v31 = vld [vmem:[%s2 + $0x18] sm:$0xff]
    %v32 = vld [vmem:[%s2 + $0x20] sm:$0xff]
    %v33 = vld [vmem:[%s2 + $0x28] sm:$0xff]
    %v34 = vld [vmem:[%s2 + $0x30] sm:$0xff]
    %v35 = vld [vmem:[%s2 + $0x38] sm:$0xff]
    %v36 = vld [vmem:[%s3] sm:$0xff]
    %vm37 = vcmask 261120
    %v38 = vsel %vm37, %v18, 0.0
    %39 = vadd.xlane.f32.xlu0 %v38
    %v40 = vpop.xlane.xlu0 %39
    %v41 = vsel %vm37, %v19, 0.0
    %42 = vadd.xlane.f32.xlu0 %v41
    %v43 = vpop.xlane.xlu0 %42
    %v44 = vrcp.pop 32.0
    %v45 = vmul.f32 %v40, %v44
    %v46 = vmul.f32 %v43, %v44
    %v47 = vsub.f32 %v18, %v45
    %v48 = vsub.f32 %v19, %v46
    %v49 = vmul.f32 %v47, %v47
    %v50 = vmul.f32 %v48, %v48
    %v51 = vsel %vm37, %v49, 0.0
    %52 = vadd.xlane.f32.xlu0 %v51
    %v53 = vpop.xlane.xlu0 %52
    %v54 = vsel %vm37, %v50, 0.0
    %55 = vadd.xlane.f32.xlu0 %v54
    %v56 = vpop.xlane.xlu0 %55
    %v57 = vmul.f32 %v53, %v44
    %v58 = vmul.f32 %v56, %v44
    %v59 = vadd.f32 %v57, 1e-05
    %v60 = vadd.f32 %v58, 1e-05
    %v61 = vrsqrt.pop %v59
    %v62 = vrsqrt.pop %v60
    %v63 = vmul.f32 %v47, %v61
    %v64 = vmul.f32 %v48, %v62
    %v65 = vlaneseq
    %v66 = vshrl.u32 %v65, 7
    %v67 = vsub.s32 0, %v66
    %v68 = vrot.slane %v36, %v67
    %v70 = vsel %vm37, %v63, 0
    %v73 = vsel %vm37, %v64, 0
    %75 = vmatprep.subr.mxu0 0.0
    %76 = vmatpush1.msra.mxu0 %v20
    %77 = vmatprep.subr.mxu0 0.0
    %78 = vmatpush1.msra.mxu0 %v22
    %79 = vmatprep.subr.mxu0 0.0
    %80 = vmatpush1.msra.mxu0 %v24
    %81 = vmatprep.subr.mxu0 0.0
    %82 = vmatpush1.msra.mxu0 %v26
    %83 = vmatprep.subr.mxu0 0.0
    %84 = vmatpush1.msra.mxu0 0.0
    %85 = vmatprep.subr.mxu0 0.0
    %86 = vmatpush1.msra.mxu0 0.0
    %87 = vmatprep.subr.mxu0 0.0
    %88 = vmatpush1.msra.mxu0 0.0
    %89 = vmatprep.subr.mxu0 0.0
    %90 = vmatpush1.msra.mxu0 0.0
    %91 = vmatprep.subr.mxu0 0.0
    %92 = vmatpush1.msra.mxu0 0.0
    %93 = vmatprep.subr.mxu0 0.0
    %94 = vmatpush1.msra.mxu0 0.0
    %95 = vmatprep.subr.mxu0 0.0
    %96 = vmatpush1.msra.mxu0 0.0
    %97 = vmatprep.subr.mxu0 0.0
    %98 = vmatpush1.msra.mxu0 0.0
    %99 = vmatprep.subr.mxu0 0.0
    %100 = vmatpush1.msra.mxu0 0.0
    %101 = vmatprep.subr.mxu0 0.0
    %102 = vmatpush1.msra.mxu0 0.0
    %103 = vmatprep.subr.mxu0 0.0
    %104 = vmatpush1.msra.mxu0 0.0
    %105 = vmatprep.subr.mxu0 0.0
    %106 = vmatpush1.msra.mxu0 0.0
    %107 = vmatprep.subr.mxu0 0.0
    %108 = vmatpush1.msra.mxu0 0.0
    %109 = vmatprep.subr.mxu0 0.0
    %110 = vmatpush1.msra.mxu0 0.0
    %111 = vmatprep.subr.mxu0 0.0
    %112 = vmatpush1.msra.mxu0 0.0
    %113 = vmatprep.subr.mxu0 0.0
    %114 = vmatpush1.msra.mxu0 0.0
    %115 = vmatprep.subr.mxu0 0.0
    %116 = vmatpush1.msra.mxu0 0.0
    %117 = vmatprep.subr.mxu0 0.0
    %118 = vmatpush1.msra.mxu0 0.0
    %119 = vmatprep.subr.mxu0 0.0
    %120 = vmatpush1.msra.mxu0 0.0
    %121 = vmatprep.subr.mxu0 0.0
    %122 = vmatpush1.msra.mxu0 0.0
    %123 = vmatprep.subr.mxu0 0.0
    %124 = vmatpush1.msra.mxu0 0.0
    %125 = vmatprep.subr.mxu0 0.0
    %126 = vmatpush1.msra.mxu0 0.0
    %127 = vmatprep.subr.mxu0 0.0
    %128 = vmatpush1.msra.mxu0 0.0
    %129 = vmatprep.subr.mxu0 0.0
    %130 = vmatpush1.msra.mxu0 0.0
    %131 = vmatprep.subr.mxu0 0.0
    %132 = vmatpush1.msra.mxu0 0.0
    %133 = vmatprep.subr.mxu0 0.0
    %134 = vmatpush1.msra.mxu0 0.0
    %135 = vmatprep.subr.mxu0 0.0
    %136 = vmatpush1.msra.mxu0 0.0
    %137 = vmatprep.subr.mxu0 0.0
    %138 = vmatpush1.msra.mxu0 0.0
    %139 = vmatprep.mubr.f32.mxu0 0.0
    %140 = vmatmul.mubr.f32.gmra.mrb[0].mxu0 %v70
    %v141 = vpop.f32.mrb[0].mxu0
    %v142 = vadd.f32 %v68, %v141
    %v143 = vpop.f32.mrb[0].mxu0
    %144 = vmatprep.mubr.f32.mxu0 0.0
    %145 = vmatmul.mubr.f32.gmra.mrb[0].mxu0 %v73
    %v146 = vpop.f32.mrb[0].mxu0
    %v147 = vadd.f32 %v68, %v146
    %v148 = vpop.f32.mrb[0].mxu0
    %149 = vdwg.mxu0
    %151 = vrot.lane.b32.xlu0 %v142, 96
    %v152 = vpop.permute.xlu0 %151
    %vm153 = vcmask 64512
    %v154 = vsel %vm153, %v142, 0
    %v156 = vsel %vm153, %v152, 0
    %158 = vmatprep.subr.mxu0 0.0
    %159 = vmatpush1.xpose.msra.mxu0 %v156
    %160 = vmatprep.subr.mxu0 0.0
    %161 = vmatpush1.xpose.msra.mxu0 0.0
    %162 = vmatprep.subr.mxu0 0.0
    %163 = vmatpush1.xpose.msra.mxu0 0.0
    %164 = vmatprep.subr.mxu0 0.0
    %165 = vmatpush1.xpose.msra.mxu0 0.0
    %166 = vmatprep.subr.mxu0 0.0
    %167 = vmatpush1.xpose.msra.mxu0 0.0
    %168 = vmatprep.subr.mxu0 0.0
    %169 = vmatpush1.xpose.msra.mxu0 0.0
    %170 = vmatprep.subr.mxu0 0.0
    %171 = vmatpush1.xpose.msra.mxu0 0.0
    %172 = vmatprep.subr.mxu0 0.0
    %173 = vmatpush1.xpose.msra.mxu0 0.0
    %174 = vmatprep.subr.mxu0 0.0
    %175 = vmatpush1.xpose.msra.mxu0 0.0
    %176 = vmatprep.subr.mxu0 0.0
    %177 = vmatpush1.xpose.msra.mxu0 0.0
    %178 = vmatprep.subr.mxu0 0.0
    %179 = vmatpush1.xpose.msra.mxu0 0.0
    %180 = vmatprep.subr.mxu0 0.0
    %181 = vmatpush1.xpose.msra.mxu0 0.0
    %182 = vmatprep.subr.mxu0 0.0
    %183 = vmatpush1.xpose.msra.mxu0 0.0
    %184 = vmatprep.subr.mxu0 0.0
    %185 = vmatpush1.xpose.msra.mxu0 0.0
    %186 = vmatprep.subr.mxu0 0.0
    %187 = vmatpush1.xpose.msra.mxu0 0.0
    %188 = vmatprep.subr.mxu0 0.0
    %189 = vmatpush1.xpose.msra.mxu0 0.0
    %190 = vmatprep.subr.mxu0 0.0
    %191 = vmatpush1.xpose.msra.mxu0 0.0
    %192 = vmatprep.subr.mxu0 0.0
    %193 = vmatpush1.xpose.msra.mxu0 0.0
    %194 = vmatprep.subr.mxu0 0.0
    %195 = vmatpush1.xpose.msra.mxu0 0.0
    %196 = vmatprep.subr.mxu0 0.0
    %197 = vmatpush1.xpose.msra.mxu0 0.0
    %198 = vmatprep.subr.mxu0 0.0
    %199 = vmatpush1.xpose.msra.mxu0 0.0
    %200 = vmatprep.subr.mxu0 0.0
    %201 = vmatpush1.xpose.msra.mxu0 0.0
    %202 = vmatprep.subr.mxu0 0.0
    %203 = vmatpush1.xpose.msra.mxu0 0.0
    %204 = vmatprep.subr.mxu0 0.0
    %205 = vmatpush1.xpose.msra.mxu0 0.0
    %206 = vmatprep.subr.mxu0 0.0
    %207 = vmatpush1.xpose.msra.mxu0 0.0
    %208 = vmatprep.subr.mxu0 0.0
    %209 = vmatpush1.xpose.msra.mxu0 0.0
    %210 = vmatprep.subr.mxu0 0.0
    %211 = vmatpush1.xpose.msra.mxu0 0.0
    %212 = vmatprep.subr.mxu0 0.0
    %213 = vmatpush1.xpose.msra.mxu0 0.0
    %214 = vmatprep.subr.mxu0 0.0
    %215 = vmatpush1.xpose.msra.mxu0 0.0
    %216 = vmatprep.subr.mxu0 0.0
    %217 = vmatpush1.xpose.msra.mxu0 0.0
    %218 = vmatprep.subr.mxu0 0.0
    %219 = vmatpush1.xpose.msra.mxu0 0.0
    %220 = vmatprep.subr.mxu0 0.0
    %221 = vmatpush1.xpose.msra.mxu0 0.0
    %222 = vmatprep.mubr.f32.mxu0 0.0
    %223 = vmatmul.mubr.f32.gmra.mrb[0].mxu0 %v154
    %v224 = vpop.f32.mrb[0].mxu0
    %v225 = vadd.f32 0.0, %v224
    %v226 = vpop.f32.mrb[0].mxu0
    %227 = vdwg.mxu0
    %229 = vrot.lane.b32.xlu0 %v147, 96
    %v230 = vpop.permute.xlu0 %229
    %v231 = vsel %vm153, %v147, 0
    %v233 = vsel %vm153, %v230, 0
    %235 = vmatprep.subr.mxu0 0.0
    %236 = vmatpush1.xpose.msra.mxu0 %v233
    %237 = vmatprep.subr.mxu0 0.0
    %238 = vmatpush1.xpose.msra.mxu0 0.0
    %239 = vmatprep.subr.mxu0 0.0
    %240 = vmatpush1.xpose.msra.mxu0 0.0
    %241 = vmatprep.subr.mxu0 0.0
    %242 = vmatpush1.xpose.msra.mxu0 0.0
    %243 = vmatprep.subr.mxu0 0.0
    %244 = vmatpush1.xpose.msra.mxu0 0.0
    %245 = vmatprep.subr.mxu0 0.0
    %246 = vmatpush1.xpose.msra.mxu0 0.0
    %247 = vmatprep.subr.mxu0 0.0
    %248 = vmatpush1.xpose.msra.mxu0 0.0
    %249 = vmatprep.subr.mxu0 0.0
    %250 = vmatpush1.xpose.msra.mxu0 0.0
    %251 = vmatprep.subr.mxu0 0.0
    %252 = vmatpush1.xpose.msra.mxu0 0.0
    %253 = vmatprep.subr.mxu0 0.0
    %254 = vmatpush1.xpose.msra.mxu0 0.0
    %255 = vmatprep.subr.mxu0 0.0
    %256 = vmatpush1.xpose.msra.mxu0 0.0
    %257 = vmatprep.subr.mxu0 0.0
    %258 = vmatpush1.xpose.msra.mxu0 0.0
    %259 = vmatprep.subr.mxu0 0.0
    %260 = vmatpush1.xpose.msra.mxu0 0.0
    %261 = vmatprep.subr.mxu0 0.0
    %262 = vmatpush1.xpose.msra.mxu0 0.0
    %263 = vmatprep.subr.mxu0 0.0
    %264 = vmatpush1.xpose.msra.mxu0 0.0
    %265 = vmatprep.subr.mxu0 0.0
    %266 = vmatpush1.xpose.msra.mxu0 0.0
    %267 = vmatprep.subr.mxu0 0.0
    %268 = vmatpush1.xpose.msra.mxu0 0.0
    %269 = vmatprep.subr.mxu0 0.0
    %270 = vmatpush1.xpose.msra.mxu0 0.0
    %271 = vmatprep.subr.mxu0 0.0
    %272 = vmatpush1.xpose.msra.mxu0 0.0
    %273 = vmatprep.subr.mxu0 0.0
    %274 = vmatpush1.xpose.msra.mxu0 0.0
    %275 = vmatprep.subr.mxu0 0.0
    %276 = vmatpush1.xpose.msra.mxu0 0.0
    %277 = vmatprep.subr.mxu0 0.0
    %278 = vmatpush1.xpose.msra.mxu0 0.0
    %279 = vmatprep.subr.mxu0 0.0
    %280 = vmatpush1.xpose.msra.mxu0 0.0
    %281 = vmatprep.subr.mxu0 0.0
    %282 = vmatpush1.xpose.msra.mxu0 0.0
    %283 = vmatprep.subr.mxu0 0.0
    %284 = vmatpush1.xpose.msra.mxu0 0.0
    %285 = vmatprep.subr.mxu0 0.0
    %286 = vmatpush1.xpose.msra.mxu0 0.0
    %287 = vmatprep.subr.mxu0 0.0
    %288 = vmatpush1.xpose.msra.mxu0 0.0
    %289 = vmatprep.subr.mxu0 0.0
    %290 = vmatpush1.xpose.msra.mxu0 0.0
    %291 = vmatprep.subr.mxu0 0.0
    %292 = vmatpush1.xpose.msra.mxu0 0.0
    %293 = vmatprep.subr.mxu0 0.0
    %294 = vmatpush1.xpose.msra.mxu0 0.0
    %295 = vmatprep.subr.mxu0 0.0
    %296 = vmatpush1.xpose.msra.mxu0 0.0
    %297 = vmatprep.subr.mxu0 0.0
    %298 = vmatpush1.xpose.msra.mxu0 0.0
    %299 = vmatprep.mubr.f32.mxu0 0.0
    %300 = vmatmul.mubr.f32.gmra.mrb[0].mxu0 %v231
    %v301 = vpop.f32.mrb[0].mxu0
    %v302 = vadd.f32 0.0, %v301
    %v303 = vpop.f32.mrb[0].mxu0
    %304 = vdwg.mxu0
    %v305 = vsel %vm153, %v225, -inf
    %306 = vmax.xlane.f32.xlu0 %v305
    %v307 = vpop.xlane.xlu0 %306
    %v308 = vsel %vm153, %v302, -inf
    %309 = vmax.xlane.f32.xlu0 %v308
    %v310 = vpop.xlane.xlu0 %309
    %v311 = vsub.f32 %v225, %v307
    %v312 = vsub.f32 %v302, %v310
    %v313 = vmul.f32 %v311, 1.442695
    %v314 = vpow.pop %v313
    %v315 = vmul.f32 %v312, 1.442695
    %v316 = vpow.pop %v315
    %v317 = vsel %vm153, %v314, 0.0
    %318 = vadd.xlane.f32.xlu0 %v317
    %v319 = vpop.xlane.xlu0 %318
    %v320 = vsel %vm153, %v316, 0.0
    %321 = vadd.xlane.f32.xlu0 %v320
    %v322 = vpop.xlane.xlu0 %321
    %v323 = vrcp.pop %v319
    %v324 = vrcp.pop %v322
    %v325 = vmul.f32 %v314, %v323
    %v326 = vmul.f32 %v316, %v324
    %327 = vrot.lane.b32.xlu0 %v142, 64
    %v328 = vpop.permute.xlu0 %327
    %v331 = vsel %vm153, %v325, 0
    %333 = vmatprep.subr.mxu0 0.0
    %334 = vmatpush1.msra.mxu0 %v328
    %335 = vmatprep.subr.mxu0 0.0
    %336 = vmatpush1.msra.mxu0 0.0
    %337 = vmatprep.subr.mxu0 0.0
    %338 = vmatpush1.msra.mxu0 0.0
    %339 = vmatprep.subr.mxu0 0.0
    %340 = vmatpush1.msra.mxu0 0.0
    %341 = vmatprep.subr.mxu0 0.0
    %342 = vmatpush1.msra.mxu0 0.0
    %343 = vmatprep.subr.mxu0 0.0
    %344 = vmatpush1.msra.mxu0 0.0
    %345 = vmatprep.subr.mxu0 0.0
    %346 = vmatpush1.msra.mxu0 0.0
    %347 = vmatprep.subr.mxu0 0.0
    %348 = vmatpush1.msra.mxu0 0.0
    %349 = vmatprep.subr.mxu0 0.0
    %350 = vmatpush1.msra.mxu0 0.0
    %351 = vmatprep.subr.mxu0 0.0
    %352 = vmatpush1.msra.mxu0 0.0
    %353 = vmatprep.subr.mxu0 0.0
    %354 = vmatpush1.msra.mxu0 0.0
    %355 = vmatprep.subr.mxu0 0.0
    %356 = vmatpush1.msra.mxu0 0.0
    %357 = vmatprep.subr.mxu0 0.0
    %358 = vmatpush1.msra.mxu0 0.0
    %359 = vmatprep.subr.mxu0 0.0
    %360 = vmatpush1.msra.mxu0 0.0
    %361 = vmatprep.subr.mxu0 0.0
    %362 = vmatpush1.msra.mxu0 0.0
    %363 = vmatprep.subr.mxu0 0.0
    %364 = vmatpush1.msra.mxu0 0.0
    %365 = vmatprep.subr.mxu0 0.0
    %366 = vmatpush1.msra.mxu0 0.0
    %367 = vmatprep.subr.mxu0 0.0
    %368 = vmatpush1.msra.mxu0 0.0
    %369 = vmatprep.subr.mxu0 0.0
    %370 = vmatpush1.msra.mxu0 0.0
    %371 = vmatprep.subr.mxu0 0.0
    %372 = vmatpush1.msra.mxu0 0.0
    %373 = vmatprep.subr.mxu0 0.0
    %374 = vmatpush1.msra.mxu0 0.0
    %375 = vmatprep.subr.mxu0 0.0
    %376 = vmatpush1.msra.mxu0 0.0
    %377 = vmatprep.subr.mxu0 0.0
    %378 = vmatpush1.msra.mxu0 0.0
    %379 = vmatprep.subr.mxu0 0.0
    %380 = vmatpush1.msra.mxu0 0.0
    %381 = vmatprep.subr.mxu0 0.0
    %382 = vmatpush1.msra.mxu0 0.0
    %383 = vmatprep.subr.mxu0 0.0
    %384 = vmatpush1.msra.mxu0 0.0
    %385 = vmatprep.subr.mxu0 0.0
    %386 = vmatpush1.msra.mxu0 0.0
    %387 = vmatprep.subr.mxu0 0.0
    %388 = vmatpush1.msra.mxu0 0.0
    %389 = vmatprep.subr.mxu0 0.0
    %390 = vmatpush1.msra.mxu0 0.0
    %391 = vmatprep.subr.mxu0 0.0
    %392 = vmatpush1.msra.mxu0 0.0
    %393 = vmatprep.subr.mxu0 0.0
    %394 = vmatpush1.msra.mxu0 0.0
    %395 = vmatprep.subr.mxu0 0.0
    %396 = vmatpush1.msra.mxu0 0.0
    %397 = vmatprep.mubr.f32.mxu0 0.0
    %398 = vmatmul.mubr.f32.gmra.mrb[0].mxu0 %v331
    %v399 = vpop.f32.mrb[0].mxu0
    %v400 = vadd.f32 0.0, %v399
    %v401 = vpop.f32.mrb[0].mxu0
    %402 = vdwg.mxu0
    %403 = vrot.lane.b32.xlu0 %v147, 64
    %v404 = vpop.permute.xlu0 %403
    %v407 = vsel %vm153, %v326, 0
    %409 = vmatprep.subr.mxu0 0.0
    %410 = vmatpush1.msra.mxu0 %v404
    %411 = vmatprep.subr.mxu0 0.0
    %412 = vmatpush1.msra.mxu0 0.0
    %413 = vmatprep.subr.mxu0 0.0
    %414 = vmatpush1.msra.mxu0 0.0
    %415 = vmatprep.subr.mxu0 0.0
    %416 = vmatpush1.msra.mxu0 0.0
    %417 = vmatprep.subr.mxu0 0.0
    %418 = vmatpush1.msra.mxu0 0.0
    %419 = vmatprep.subr.mxu0 0.0
    %420 = vmatpush1.msra.mxu0 0.0
    %421 = vmatprep.subr.mxu0 0.0
    %422 = vmatpush1.msra.mxu0 0.0
    %423 = vmatprep.subr.mxu0 0.0
    %424 = vmatpush1.msra.mxu0 0.0
    %425 = vmatprep.subr.mxu0 0.0
    %426 = vmatpush1.msra.mxu0 0.0
    %427 = vmatprep.subr.mxu0 0.0
    %428 = vmatpush1.msra.mxu0 0.0
    %429 = vmatprep.subr.mxu0 0.0
    %430 = vmatpush1.msra.mxu0 0.0
    %431 = vmatprep.subr.mxu0 0.0
    %432 = vmatpush1.msra.mxu0 0.0
    %433 = vmatprep.subr.mxu0 0.0
    %434 = vmatpush1.msra.mxu0 0.0
    %435 = vmatprep.subr.mxu0 0.0
    %436 = vmatpush1.msra.mxu0 0.0
    %437 = vmatprep.subr.mxu0 0.0
    %438 = vmatpush1.msra.mxu0 0.0
    %439 = vmatprep.subr.mxu0 0.0
    %440 = vmatpush1.msra.mxu0 0.0
    %441 = vmatprep.subr.mxu0 0.0
    %442 = vmatpush1.msra.mxu0 0.0
    %443 = vmatprep.subr.mxu0 0.0
    %444 = vmatpush1.msra.mxu0 0.0
    %445 = vmatprep.subr.mxu0 0.0
    %446 = vmatpush1.msra.mxu0 0.0
    %447 = vmatprep.subr.mxu0 0.0
    %448 = vmatpush1.msra.mxu0 0.0
    %449 = vmatprep.subr.mxu0 0.0
    %450 = vmatpush1.msra.mxu0 0.0
    %451 = vmatprep.subr.mxu0 0.0
    %452 = vmatpush1.msra.mxu0 0.0
    %453 = vmatprep.subr.mxu0 0.0
    %454 = vmatpush1.msra.mxu0 0.0
    %455 = vmatprep.subr.mxu0 0.0
    %456 = vmatpush1.msra.mxu0 0.0
    %457 = vmatprep.subr.mxu0 0.0
    %458 = vmatpush1.msra.mxu0 0.0
    %459 = vmatprep.subr.mxu0 0.0
    %460 = vmatpush1.msra.mxu0 0.0
    %461 = vmatprep.subr.mxu0 0.0
    %462 = vmatpush1.msra.mxu0 0.0
    %463 = vmatprep.subr.mxu0 0.0
    %464 = vmatpush1.msra.mxu0 0.0
    %465 = vmatprep.subr.mxu0 0.0
    %466 = vmatpush1.msra.mxu0 0.0
    %467 = vmatprep.subr.mxu0 0.0
    %468 = vmatpush1.msra.mxu0 0.0
    %469 = vmatprep.subr.mxu0 0.0
    %470 = vmatpush1.msra.mxu0 0.0
    %471 = vmatprep.subr.mxu0 0.0
    %472 = vmatpush1.msra.mxu0 0.0
    %473 = vmatprep.mubr.f32.mxu0 0.0
    %474 = vmatmul.mubr.f32.gmra.mrb[0].mxu0 %v407
    %v475 = vpop.f32.mrb[0].mxu0
    %v476 = vadd.f32 0.0, %v475
    %v477 = vpop.f32.mrb[0].mxu0
    %478 = vdwg.mxu0
    %479 = vrot.lane.b32.xlu0 %v142, 120
    %v480 = vpop.permute.xlu0 %479
    %481 = vrot.lane.b32.xlu0 %v142, 88
    %v482 = vpop.permute.xlu0 %481
    %v483 = vsel %vm153, %v480, 0
    %v485 = vsel %vm153, %v482, 0
    %487 = vmatprep.subr.mxu0 0.0
    %488 = vmatpush1.xpose.msra.mxu0 %v485
    %489 = vmatprep.subr.mxu0 0.0
    %490 = vmatpush1.xpose.msra.mxu0 0.0
    %491 = vmatprep.subr.mxu0 0.0
    %492 = vmatpush1.xpose.msra.mxu0 0.0
    %493 = vmatprep.subr.mxu0 0.0
    %494 = vmatpush1.xpose.msra.mxu0 0.0
    %495 = vmatprep.subr.mxu0 0.0
    %496 = vmatpush1.xpose.msra.mxu0 0.0
    %497 = vmatprep.subr.mxu0 0.0
    %498 = vmatpush1.xpose.msra.mxu0 0.0
    %499 = vmatprep.subr.mxu0 0.0
    %500 = vmatpush1.xpose.msra.mxu0 0.0
    %501 = vmatprep.subr.mxu0 0.0
    %502 = vmatpush1.xpose.msra.mxu0 0.0
    %503 = vmatprep.subr.mxu0 0.0
    %504 = vmatpush1.xpose.msra.mxu0 0.0
    %505 = vmatprep.subr.mxu0 0.0
    %506 = vmatpush1.xpose.msra.mxu0 0.0
    %507 = vmatprep.subr.mxu0 0.0
    %508 = vmatpush1.xpose.msra.mxu0 0.0
    %509 = vmatprep.subr.mxu0 0.0
    %510 = vmatpush1.xpose.msra.mxu0 0.0
    %511 = vmatprep.subr.mxu0 0.0
    %512 = vmatpush1.xpose.msra.mxu0 0.0
    %513 = vmatprep.subr.mxu0 0.0
    %514 = vmatpush1.xpose.msra.mxu0 0.0
    %515 = vmatprep.subr.mxu0 0.0
    %516 = vmatpush1.xpose.msra.mxu0 0.0
    %517 = vmatprep.subr.mxu0 0.0
    %518 = vmatpush1.xpose.msra.mxu0 0.0
    %519 = vmatprep.subr.mxu0 0.0
    %520 = vmatpush1.xpose.msra.mxu0 0.0
    %521 = vmatprep.subr.mxu0 0.0
    %522 = vmatpush1.xpose.msra.mxu0 0.0
    %523 = vmatprep.subr.mxu0 0.0
    %524 = vmatpush1.xpose.msra.mxu0 0.0
    %525 = vmatprep.subr.mxu0 0.0
    %526 = vmatpush1.xpose.msra.mxu0 0.0
    %527 = vmatprep.subr.mxu0 0.0
    %528 = vmatpush1.xpose.msra.mxu0 0.0
    %529 = vmatprep.subr.mxu0 0.0
    %530 = vmatpush1.xpose.msra.mxu0 0.0
    %531 = vmatprep.subr.mxu0 0.0
    %532 = vmatpush1.xpose.msra.mxu0 0.0
    %533 = vmatprep.subr.mxu0 0.0
    %534 = vmatpush1.xpose.msra.mxu0 0.0
    %535 = vmatprep.subr.mxu0 0.0
    %536 = vmatpush1.xpose.msra.mxu0 0.0
    %537 = vmatprep.subr.mxu0 0.0
    %538 = vmatpush1.xpose.msra.mxu0 0.0
    %539 = vmatprep.subr.mxu0 0.0
    %540 = vmatpush1.xpose.msra.mxu0 0.0
    %541 = vmatprep.subr.mxu0 0.0
    %542 = vmatpush1.xpose.msra.mxu0 0.0
    %543 = vmatprep.subr.mxu0 0.0
    %544 = vmatpush1.xpose.msra.mxu0 0.0
    %545 = vmatprep.subr.mxu0 0.0
    %546 = vmatpush1.xpose.msra.mxu0 0.0
    %547 = vmatprep.subr.mxu0 0.0
    %548 = vmatpush1.xpose.msra.mxu0 0.0
    %549 = vmatprep.subr.mxu0 0.0
    %550 = vmatpush1.xpose.msra.mxu0 0.0
    %551 = vmatprep.mubr.f32.mxu0 0.0
    %552 = vmatmul.mubr.f32.gmra.mrb[0].mxu0 %v483
    %v553 = vpop.f32.mrb[0].mxu0
    %v554 = vadd.f32 0.0, %v553
    %v555 = vpop.f32.mrb[0].mxu0
    %556 = vdwg.mxu0
    %557 = vrot.lane.b32.xlu0 %v147, 120
    %v558 = vpop.permute.xlu0 %557
    %559 = vrot.lane.b32.xlu0 %v147, 88
    %v560 = vpop.permute.xlu0 %559
    %v561 = vsel %vm153, %v558, 0
    %v563 = vsel %vm153, %v560, 0
    %565 = vmatprep.subr.mxu0 0.0
    %566 = vmatpush1.xpose.msra.mxu0 %v563
    %567 = vmatprep.subr.mxu0 0.0
    %568 = vmatpush1.xpose.msra.mxu0 0.0
    %569 = vmatprep.subr.mxu0 0.0
    %570 = vmatpush1.xpose.msra.mxu0 0.0
    %571 = vmatprep.subr.mxu0 0.0
    %572 = vmatpush1.xpose.msra.mxu0 0.0
    %573 = vmatprep.subr.mxu0 0.0
    %574 = vmatpush1.xpose.msra.mxu0 0.0
    %575 = vmatprep.subr.mxu0 0.0
    %576 = vmatpush1.xpose.msra.mxu0 0.0
    %577 = vmatprep.subr.mxu0 0.0
    %578 = vmatpush1.xpose.msra.mxu0 0.0
    %579 = vmatprep.subr.mxu0 0.0
    %580 = vmatpush1.xpose.msra.mxu0 0.0
    %581 = vmatprep.subr.mxu0 0.0
    %582 = vmatpush1.xpose.msra.mxu0 0.0
    %583 = vmatprep.subr.mxu0 0.0
    %584 = vmatpush1.xpose.msra.mxu0 0.0
    %585 = vmatprep.subr.mxu0 0.0
    %586 = vmatpush1.xpose.msra.mxu0 0.0
    %587 = vmatprep.subr.mxu0 0.0
    %588 = vmatpush1.xpose.msra.mxu0 0.0
    %589 = vmatprep.subr.mxu0 0.0
    %590 = vmatpush1.xpose.msra.mxu0 0.0
    %591 = vmatprep.subr.mxu0 0.0
    %592 = vmatpush1.xpose.msra.mxu0 0.0
    %593 = vmatprep.subr.mxu0 0.0
    %594 = vmatpush1.xpose.msra.mxu0 0.0
    %595 = vmatprep.subr.mxu0 0.0
    %596 = vmatpush1.xpose.msra.mxu0 0.0
    %597 = vmatprep.subr.mxu0 0.0
    %598 = vmatpush1.xpose.msra.mxu0 0.0
    %599 = vmatprep.subr.mxu0 0.0
    %600 = vmatpush1.xpose.msra.mxu0 0.0
    %601 = vmatprep.subr.mxu0 0.0
    %602 = vmatpush1.xpose.msra.mxu0 0.0
    %603 = vmatprep.subr.mxu0 0.0
    %604 = vmatpush1.xpose.msra.mxu0 0.0
    %605 = vmatprep.subr.mxu0 0.0
    %606 = vmatpush1.xpose.msra.mxu0 0.0
    %607 = vmatprep.subr.mxu0 0.0
    %608 = vmatpush1.xpose.msra.mxu0 0.0
    %609 = vmatprep.subr.mxu0 0.0
    %610 = vmatpush1.xpose.msra.mxu0 0.0
    %611 = vmatprep.subr.mxu0 0.0
    %612 = vmatpush1.xpose.msra.mxu0 0.0
    %613 = vmatprep.subr.mxu0 0.0
    %614 = vmatpush1.xpose.msra.mxu0 0.0
    %615 = vmatprep.subr.mxu0 0.0
    %616 = vmatpush1.xpose.msra.mxu0 0.0
    %617 = vmatprep.subr.mxu0 0.0
    %618 = vmatpush1.xpose.msra.mxu0 0.0
    %619 = vmatprep.subr.mxu0 0.0
    %620 = vmatpush1.xpose.msra.mxu0 0.0
    %621 = vmatprep.subr.mxu0 0.0
    %622 = vmatpush1.xpose.msra.mxu0 0.0
    %623 = vmatprep.subr.mxu0 0.0
    %624 = vmatpush1.xpose.msra.mxu0 0.0
    %625 = vmatprep.subr.mxu0 0.0
    %626 = vmatpush1.xpose.msra.mxu0 0.0
    %627 = vmatprep.subr.mxu0 0.0
    %628 = vmatpush1.xpose.msra.mxu0 0.0
    %629 = vmatprep.mubr.f32.mxu0 0.0
    %630 = vmatmul.mubr.f32.gmra.mrb[0].mxu0 %v561
    %v631 = vpop.f32.mrb[0].mxu0
    %v632 = vadd.f32 0.0, %v631
    %v633 = vpop.f32.mrb[0].mxu0
    %634 = vdwg.mxu0
    %v635 = vsel %vm153, %v554, -inf
    %636 = vmax.xlane.f32.xlu0 %v635
    %v637 = vpop.xlane.xlu0 %636
    %v638 = vsel %vm153, %v632, -inf
    %639 = vmax.xlane.f32.xlu0 %v638
    %v640 = vpop.xlane.xlu0 %639
    %v641 = vsub.f32 %v554, %v637
    %v642 = vsub.f32 %v632, %v640
    %v643 = vmul.f32 %v641, 1.442695
    %v644 = vpow.pop %v643
    %v645 = vmul.f32 %v642, 1.442695
    %v646 = vpow.pop %v645
    %v647 = vsel %vm153, %v644, 0.0
    %648 = vadd.xlane.f32.xlu0 %v647
    %v649 = vpop.xlane.xlu0 %648
    %v650 = vsel %vm153, %v646, 0.0
    %651 = vadd.xlane.f32.xlu0 %v650
    %v652 = vpop.xlane.xlu0 %651
    %v653 = vrcp.pop %v649
    %v654 = vrcp.pop %v652
    %v655 = vmul.f32 %v644, %v653
    %v656 = vmul.f32 %v646, %v654
    %657 = vrot.lane.b32.xlu0 %v142, 56
    %v658 = vpop.permute.xlu0 %657
    %v661 = vsel %vm153, %v655, 0
    %663 = vmatprep.subr.mxu0 0.0
    %664 = vmatpush1.msra.mxu0 %v658
    %665 = vmatprep.subr.mxu0 0.0
    %666 = vmatpush1.msra.mxu0 0.0
    %667 = vmatprep.subr.mxu0 0.0
    %668 = vmatpush1.msra.mxu0 0.0
    %669 = vmatprep.subr.mxu0 0.0
    %670 = vmatpush1.msra.mxu0 0.0
    %671 = vmatprep.subr.mxu0 0.0
    %672 = vmatpush1.msra.mxu0 0.0
    %673 = vmatprep.subr.mxu0 0.0
    %674 = vmatpush1.msra.mxu0 0.0
    %675 = vmatprep.subr.mxu0 0.0
    %676 = vmatpush1.msra.mxu0 0.0
    %677 = vmatprep.subr.mxu0 0.0
    %678 = vmatpush1.msra.mxu0 0.0
    %679 = vmatprep.subr.mxu0 0.0
    %680 = vmatpush1.msra.mxu0 0.0
    %681 = vmatprep.subr.mxu0 0.0
    %682 = vmatpush1.msra.mxu0 0.0
    %683 = vmatprep.subr.mxu0 0.0
    %684 = vmatpush1.msra.mxu0 0.0
    %685 = vmatprep.subr.mxu0 0.0
    %686 = vmatpush1.msra.mxu0 0.0
    %687 = vmatprep.subr.mxu0 0.0
    %688 = vmatpush1.msra.mxu0 0.0
    %689 = vmatprep.subr.mxu0 0.0
    %690 = vmatpush1.msra.mxu0 0.0
    %691 = vmatprep.subr.mxu0 0.0
    %692 = vmatpush1.msra.mxu0 0.0
    %693 = vmatprep.subr.mxu0 0.0
    %694 = vmatpush1.msra.mxu0 0.0
    %695 = vmatprep.subr.mxu0 0.0
    %696 = vmatpush1.msra.mxu0 0.0
    %697 = vmatprep.subr.mxu0 0.0
    %698 = vmatpush1.msra.mxu0 0.0
    %699 = vmatprep.subr.mxu0 0.0
    %700 = vmatpush1.msra.mxu0 0.0
    %701 = vmatprep.subr.mxu0 0.0
    %702 = vmatpush1.msra.mxu0 0.0
    %703 = vmatprep.subr.mxu0 0.0
    %704 = vmatpush1.msra.mxu0 0.0
    %705 = vmatprep.subr.mxu0 0.0
    %706 = vmatpush1.msra.mxu0 0.0
    %707 = vmatprep.subr.mxu0 0.0
    %708 = vmatpush1.msra.mxu0 0.0
    %709 = vmatprep.subr.mxu0 0.0
    %710 = vmatpush1.msra.mxu0 0.0
    %711 = vmatprep.subr.mxu0 0.0
    %712 = vmatpush1.msra.mxu0 0.0
    %713 = vmatprep.subr.mxu0 0.0
    %714 = vmatpush1.msra.mxu0 0.0
    %715 = vmatprep.subr.mxu0 0.0
    %716 = vmatpush1.msra.mxu0 0.0
    %717 = vmatprep.subr.mxu0 0.0
    %718 = vmatpush1.msra.mxu0 0.0
    %719 = vmatprep.subr.mxu0 0.0
    %720 = vmatpush1.msra.mxu0 0.0
    %721 = vmatprep.subr.mxu0 0.0
    %722 = vmatpush1.msra.mxu0 0.0
    %723 = vmatprep.subr.mxu0 0.0
    %724 = vmatpush1.msra.mxu0 0.0
    %725 = vmatprep.subr.mxu0 0.0
    %726 = vmatpush1.msra.mxu0 0.0
    %727 = vmatprep.mubr.f32.mxu0 0.0
    %728 = vmatmul.mubr.f32.gmra.mrb[0].mxu0 %v661
    %v729 = vpop.f32.mrb[0].mxu0
    %v730 = vadd.f32 0.0, %v729
    %v731 = vpop.f32.mrb[0].mxu0
    %732 = vdwg.mxu0
    %733 = vrot.lane.b32.xlu0 %v147, 56
    %v734 = vpop.permute.xlu0 %733
    %v737 = vsel %vm153, %v656, 0
    %739 = vmatprep.subr.mxu0 0.0
    %740 = vmatpush1.msra.mxu0 %v734
    %741 = vmatprep.subr.mxu0 0.0
    %742 = vmatpush1.msra.mxu0 0.0
    %743 = vmatprep.subr.mxu0 0.0
    %744 = vmatpush1.msra.mxu0 0.0
    %745 = vmatprep.subr.mxu0 0.0
    %746 = vmatpush1.msra.mxu0 0.0
    %747 = vmatprep.subr.mxu0 0.0
    %748 = vmatpush1.msra.mxu0 0.0
    %749 = vmatprep.subr.mxu0 0.0
    %750 = vmatpush1.msra.mxu0 0.0
    %751 = vmatprep.subr.mxu0 0.0
    %752 = vmatpush1.msra.mxu0 0.0
    %753 = vmatprep.subr.mxu0 0.0
    %754 = vmatpush1.msra.mxu0 0.0
    %755 = vmatprep.subr.mxu0 0.0
    %756 = vmatpush1.msra.mxu0 0.0
    %757 = vmatprep.subr.mxu0 0.0
    %758 = vmatpush1.msra.mxu0 0.0
    %759 = vmatprep.subr.mxu0 0.0
    %760 = vmatpush1.msra.mxu0 0.0
    %761 = vmatprep.subr.mxu0 0.0
    %762 = vmatpush1.msra.mxu0 0.0
    %763 = vmatprep.subr.mxu0 0.0
    %764 = vmatpush1.msra.mxu0 0.0
    %765 = vmatprep.subr.mxu0 0.0
    %766 = vmatpush1.msra.mxu0 0.0
    %767 = vmatprep.subr.mxu0 0.0
    %768 = vmatpush1.msra.mxu0 0.0
    %769 = vmatprep.subr.mxu0 0.0
    %770 = vmatpush1.msra.mxu0 0.0
    %771 = vmatprep.subr.mxu0 0.0
    %772 = vmatpush1.msra.mxu0 0.0
    %773 = vmatprep.subr.mxu0 0.0
    %774 = vmatpush1.msra.mxu0 0.0
    %775 = vmatprep.subr.mxu0 0.0
    %776 = vmatpush1.msra.mxu0 0.0
    %777 = vmatprep.subr.mxu0 0.0
    %778 = vmatpush1.msra.mxu0 0.0
    %779 = vmatprep.subr.mxu0 0.0
    %780 = vmatpush1.msra.mxu0 0.0
    %781 = vmatprep.subr.mxu0 0.0
    %782 = vmatpush1.msra.mxu0 0.0
    %783 = vmatprep.subr.mxu0 0.0
    %784 = vmatpush1.msra.mxu0 0.0
    %785 = vmatprep.subr.mxu0 0.0
    %786 = vmatpush1.msra.mxu0 0.0
    %787 = vmatprep.subr.mxu0 0.0
    %788 = vmatpush1.msra.mxu0 0.0
    %789 = vmatprep.subr.mxu0 0.0
    %790 = vmatpush1.msra.mxu0 0.0
    %791 = vmatprep.subr.mxu0 0.0
    %792 = vmatpush1.msra.mxu0 0.0
    %793 = vmatprep.subr.mxu0 0.0
    %794 = vmatpush1.msra.mxu0 0.0
    %795 = vmatprep.subr.mxu0 0.0
    %796 = vmatpush1.msra.mxu0 0.0
    %797 = vmatprep.subr.mxu0 0.0
    %798 = vmatpush1.msra.mxu0 0.0
    %799 = vmatprep.subr.mxu0 0.0
    %800 = vmatpush1.msra.mxu0 0.0
    %801 = vmatprep.subr.mxu0 0.0
    %802 = vmatpush1.msra.mxu0 0.0
    %803 = vmatprep.mubr.f32.mxu0 0.0
    %804 = vmatmul.mubr.f32.gmra.mrb[0].mxu0 %v737
    %v805 = vpop.f32.mrb[0].mxu0
    %v806 = vadd.f32 0.0, %v805
    %v807 = vpop.f32.mrb[0].mxu0
    %808 = vdwg.mxu0
    %810 = vrot.lane.b32.xlu0 %v22, 32
    %v811 = vpop.permute.xlu0 %810
    %v814 = vsel %vm153, %v730, 0
    %v817 = vsel %vm153, %v806, 0
    %819 = vmatprep.subr.mxu0 0.0
    %820 = vmatpush1.msra.mxu0 %v811
    %821 = vmatprep.subr.mxu0 0.0
    %822 = vmatpush1.msra.mxu0 0.0
    %823 = vmatprep.subr.mxu0 0.0
    %824 = vmatpush1.msra.mxu0 0.0
    %825 = vmatprep.subr.mxu0 0.0
    %826 = vmatpush1.msra.mxu0 0.0
    %827 = vmatprep.subr.mxu0 0.0
    %828 = vmatpush1.msra.mxu0 0.0
    %829 = vmatprep.subr.mxu0 0.0
    %830 = vmatpush1.msra.mxu0 0.0
    %831 = vmatprep.subr.mxu0 0.0
    %832 = vmatpush1.msra.mxu0 0.0
    %833 = vmatprep.subr.mxu0 0.0
    %834 = vmatpush1.msra.mxu0 0.0
    %835 = vmatprep.subr.mxu0 0.0
    %836 = vmatpush1.msra.mxu0 0.0
    %837 = vmatprep.subr.mxu0 0.0
    %838 = vmatpush1.msra.mxu0 0.0
    %839 = vmatprep.subr.mxu0 0.0
    %840 = vmatpush1.msra.mxu0 0.0
    %841 = vmatprep.subr.mxu0 0.0
    %842 = vmatpush1.msra.mxu0 0.0
    %843 = vmatprep.subr.mxu0 0.0
    %844 = vmatpush1.msra.mxu0 0.0
    %845 = vmatprep.subr.mxu0 0.0
    %846 = vmatpush1.msra.mxu0 0.0
    %847 = vmatprep.subr.mxu0 0.0
    %848 = vmatpush1.msra.mxu0 0.0
    %849 = vmatprep.subr.mxu0 0.0
    %850 = vmatpush1.msra.mxu0 0.0
    %851 = vmatprep.subr.mxu0 0.0
    %852 = vmatpush1.msra.mxu0 0.0
    %853 = vmatprep.subr.mxu0 0.0
    %854 = vmatpush1.msra.mxu0 0.0
    %855 = vmatprep.subr.mxu0 0.0
    %856 = vmatpush1.msra.mxu0 0.0
    %857 = vmatprep.subr.mxu0 0.0
    %858 = vmatpush1.msra.mxu0 0.0
    %859 = vmatprep.subr.mxu0 0.0
    %860 = vmatpush1.msra.mxu0 0.0
    %861 = vmatprep.subr.mxu0 0.0
    %862 = vmatpush1.msra.mxu0 0.0
    %863 = vmatprep.subr.mxu0 0.0
    %864 = vmatpush1.msra.mxu0 0.0
    %865 = vmatprep.subr.mxu0 0.0
    %866 = vmatpush1.msra.mxu0 0.0
    %867 = vmatprep.subr.mxu0 0.0
    %868 = vmatpush1.msra.mxu0 0.0
    %869 = vmatprep.subr.mxu0 0.0
    %870 = vmatpush1.msra.mxu0 0.0
    %871 = vmatprep.subr.mxu0 0.0
    %872 = vmatpush1.msra.mxu0 0.0
    %873 = vmatprep.subr.mxu0 0.0
    %874 = vmatpush1.msra.mxu0 0.0
    %875 = vmatprep.subr.mxu0 0.0
    %876 = vmatpush1.msra.mxu0 0.0
    %877 = vmatprep.subr.mxu0 0.0
    %878 = vmatpush1.msra.mxu0 0.0
    %879 = vmatprep.subr.mxu0 0.0
    %880 = vmatpush1.msra.mxu0 0.0
    %881 = vmatprep.subr.mxu0 0.0
    %882 = vmatpush1.msra.mxu0 0.0
    %883 = vmatprep.mubr.f32.mxu0 0.0
    %884 = vmatmul.mubr.f32.gmra.mrb[0].mxu0 %v814
    %v885 = vpop.f32.mrb[0].mxu0
    %v886 = vadd.f32 0.0, %v885
    %v887 = vpop.f32.mrb[0].mxu0
    %888 = vmatprep.mubr.f32.mxu0 0.0
    %889 = vmatmul.mubr.f32.gmra.mrb[0].mxu0 %v817
    %v890 = vpop.f32.mrb[0].mxu0
    %v891 = vadd.f32 0.0, %v890
    %v892 = vpop.f32.mrb[0].mxu0
    %893 = vdwg.mxu0
    %895 = vrot.lane.b32.xlu0 %v20, 32
    %v896 = vpop.permute.xlu0 %895
    %v899 = vsel %vm153, %v400, 0
    %v902 = vsel %vm153, %v476, 0
    %904 = vmatprep.subr.mxu0 0.0
    %905 = vmatpush1.msra.mxu0 %v896
    %906 = vmatprep.subr.mxu0 0.0
    %907 = vmatpush1.msra.mxu0 0.0
    %908 = vmatprep.subr.mxu0 0.0
    %909 = vmatpush1.msra.mxu0 0.0
    %910 = vmatprep.subr.mxu0 0.0
    %911 = vmatpush1.msra.mxu0 0.0
    %912 = vmatprep.subr.mxu0 0.0
    %913 = vmatpush1.msra.mxu0 0.0
    %914 = vmatprep.subr.mxu0 0.0
    %915 = vmatpush1.msra.mxu0 0.0
    %916 = vmatprep.subr.mxu0 0.0
    %917 = vmatpush1.msra.mxu0 0.0
    %918 = vmatprep.subr.mxu0 0.0
    %919 = vmatpush1.msra.mxu0 0.0
    %920 = vmatprep.subr.mxu0 0.0
    %921 = vmatpush1.msra.mxu0 0.0
    %922 = vmatprep.subr.mxu0 0.0
    %923 = vmatpush1.msra.mxu0 0.0
    %924 = vmatprep.subr.mxu0 0.0
    %925 = vmatpush1.msra.mxu0 0.0
    %926 = vmatprep.subr.mxu0 0.0
    %927 = vmatpush1.msra.mxu0 0.0
    %928 = vmatprep.subr.mxu0 0.0
    %929 = vmatpush1.msra.mxu0 0.0
    %930 = vmatprep.subr.mxu0 0.0
    %931 = vmatpush1.msra.mxu0 0.0
    %932 = vmatprep.subr.mxu0 0.0
    %933 = vmatpush1.msra.mxu0 0.0
    %934 = vmatprep.subr.mxu0 0.0
    %935 = vmatpush1.msra.mxu0 0.0
    %936 = vmatprep.subr.mxu0 0.0
    %937 = vmatpush1.msra.mxu0 0.0
    %938 = vmatprep.subr.mxu0 0.0
    %939 = vmatpush1.msra.mxu0 0.0
    %940 = vmatprep.subr.mxu0 0.0
    %941 = vmatpush1.msra.mxu0 0.0
    %942 = vmatprep.subr.mxu0 0.0
    %943 = vmatpush1.msra.mxu0 0.0
    %944 = vmatprep.subr.mxu0 0.0
    %945 = vmatpush1.msra.mxu0 0.0
    %946 = vmatprep.subr.mxu0 0.0
    %947 = vmatpush1.msra.mxu0 0.0
    %948 = vmatprep.subr.mxu0 0.0
    %949 = vmatpush1.msra.mxu0 0.0
    %950 = vmatprep.subr.mxu0 0.0
    %951 = vmatpush1.msra.mxu0 0.0
    %952 = vmatprep.subr.mxu0 0.0
    %953 = vmatpush1.msra.mxu0 0.0
    %954 = vmatprep.subr.mxu0 0.0
    %955 = vmatpush1.msra.mxu0 0.0
    %956 = vmatprep.subr.mxu0 0.0
    %957 = vmatpush1.msra.mxu0 0.0
    %958 = vmatprep.subr.mxu0 0.0
    %959 = vmatpush1.msra.mxu0 0.0
    %960 = vmatprep.subr.mxu0 0.0
    %961 = vmatpush1.msra.mxu0 0.0
    %962 = vmatprep.subr.mxu0 0.0
    %963 = vmatpush1.msra.mxu0 0.0
    %964 = vmatprep.subr.mxu0 0.0
    %965 = vmatpush1.msra.mxu0 0.0
    %966 = vmatprep.subr.mxu0 0.0
    %967 = vmatpush1.msra.mxu0 0.0
    %968 = vmatprep.mubr.f32.mxu0 0.0
    %969 = vmatmul.mubr.f32.gmra.mrb[0].mxu0 %v899
    %v970 = vpop.f32.mrb[0].mxu0
    %v971 = vadd.f32 %v886, %v970
    %v972 = vpop.f32.mrb[0].mxu0
    %973 = vmatprep.mubr.f32.mxu0 0.0
    %974 = vmatmul.mubr.f32.gmra.mrb[0].mxu0 %v902
    %v975 = vpop.f32.mrb[0].mxu0
    %v976 = vadd.f32 %v891, %v975
    %v977 = vpop.f32.mrb[0].mxu0
    %978 = vdwg.mxu0
    %979 = vrot.lane.b32.xlu0 %v142, 112
    %v980 = vpop.permute.xlu0 %979
    %981 = vrot.lane.b32.xlu0 %v142, 80
    %v982 = vpop.permute.xlu0 %981
    %v983 = vsel %vm153, %v980, 0
    %v985 = vsel %vm153, %v982, 0
    %987 = vmatprep.subr.mxu0 0.0
    %988 = vmatpush1.xpose.msra.mxu0 %v985
    %989 = vmatprep.subr.mxu0 0.0
    %990 = vmatpush1.xpose.msra.mxu0 0.0
    %991 = vmatprep.subr.mxu0 0.0
    %992 = vmatpush1.xpose.msra.mxu0 0.0
    %993 = vmatprep.subr.mxu0 0.0
    %994 = vmatpush1.xpose.msra.mxu0 0.0
    %995 = vmatprep.subr.mxu0 0.0
    %996 = vmatpush1.xpose.msra.mxu0 0.0
    %997 = vmatprep.subr.mxu0 0.0
    %998 = vmatpush1.xpose.msra.mxu0 0.0
    %999 = vmatprep.subr.mxu0 0.0
    %1000 = vmatpush1.xpose.msra.mxu0 0.0
    %1001 = vmatprep.subr.mxu0 0.0
    %1002 = vmatpush1.xpose.msra.mxu0 0.0
    %1003 = vmatprep.subr.mxu0 0.0
    %1004 = vmatpush1.xpose.msra.mxu0 0.0
    %1005 = vmatprep.subr.mxu0 0.0
    %1006 = vmatpush1.xpose.msra.mxu0 0.0
    %1007 = vmatprep.subr.mxu0 0.0
    %1008 = vmatpush1.xpose.msra.mxu0 0.0
    %1009 = vmatprep.subr.mxu0 0.0
    %1010 = vmatpush1.xpose.msra.mxu0 0.0
    %1011 = vmatprep.subr.mxu0 0.0
    %1012 = vmatpush1.xpose.msra.mxu0 0.0
    %1013 = vmatprep.subr.mxu0 0.0
    %1014 = vmatpush1.xpose.msra.mxu0 0.0
    %1015 = vmatprep.subr.mxu0 0.0
    %1016 = vmatpush1.xpose.msra.mxu0 0.0
    %1017 = vmatprep.subr.mxu0 0.0
    %1018 = vmatpush1.xpose.msra.mxu0 0.0
    %1019 = vmatprep.subr.mxu0 0.0
    %1020 = vmatpush1.xpose.msra.mxu0 0.0
    %1021 = vmatprep.subr.mxu0 0.0
    %1022 = vmatpush1.xpose.msra.mxu0 0.0
    %1023 = vmatprep.subr.mxu0 0.0
    %1024 = vmatpush1.xpose.msra.mxu0 0.0
    %1025 = vmatprep.subr.mxu0 0.0
    %1026 = vmatpush1.xpose.msra.mxu0 0.0
    %1027 = vmatprep.subr.mxu0 0.0
    %1028 = vmatpush1.xpose.msra.mxu0 0.0
    %1029 = vmatprep.subr.mxu0 0.0
    %1030 = vmatpush1.xpose.msra.mxu0 0.0
    %1031 = vmatprep.subr.mxu0 0.0
    %1032 = vmatpush1.xpose.msra.mxu0 0.0
    %1033 = vmatprep.subr.mxu0 0.0
    %1034 = vmatpush1.xpose.msra.mxu0 0.0
    %1035 = vmatprep.subr.mxu0 0.0
    %1036 = vmatpush1.xpose.msra.mxu0 0.0
    %1037 = vmatprep.subr.mxu0 0.0
    %1038 = vmatpush1.xpose.msra.mxu0 0.0
    %1039 = vmatprep.subr.mxu0 0.0
    %1040 = vmatpush1.xpose.msra.mxu0 0.0
    %1041 = vmatprep.subr.mxu0 0.0
    %1042 = vmatpush1.xpose.msra.mxu0 0.0
    %1043 = vmatprep.subr.mxu0 0.0
    %1044 = vmatpush1.xpose.msra.mxu0 0.0
    %1045 = vmatprep.subr.mxu0 0.0
    %1046 = vmatpush1.xpose.msra.mxu0 0.0
    %1047 = vmatprep.subr.mxu0 0.0
    %1048 = vmatpush1.xpose.msra.mxu0 0.0
    %1049 = vmatprep.subr.mxu0 0.0
    %1050 = vmatpush1.xpose.msra.mxu0 0.0
    %1051 = vmatprep.mubr.f32.mxu0 0.0
    %1052 = vmatmul.mubr.f32.gmra.mrb[0].mxu0 %v983
    %v1053 = vpop.f32.mrb[0].mxu0
    %v1054 = vadd.f32 0.0, %v1053
    %v1055 = vpop.f32.mrb[0].mxu0
    %1056 = vdwg.mxu0
    %1057 = vrot.lane.b32.xlu0 %v147, 112
    %v1058 = vpop.permute.xlu0 %1057
    %1059 = vrot.lane.b32.xlu0 %v147, 80
    %v1060 = vpop.permute.xlu0 %1059
    %v1061 = vsel %vm153, %v1058, 0
    %v1063 = vsel %vm153, %v1060, 0
    %1065 = vmatprep.subr.mxu0 0.0
    %1066 = vmatpush1.xpose.msra.mxu0 %v1063
    %1067 = vmatprep.subr.mxu0 0.0
    %1068 = vmatpush1.xpose.msra.mxu0 0.0
    %1069 = vmatprep.subr.mxu0 0.0
    %1070 = vmatpush1.xpose.msra.mxu0 0.0
    %1071 = vmatprep.subr.mxu0 0.0
    %1072 = vmatpush1.xpose.msra.mxu0 0.0
    %1073 = vmatprep.subr.mxu0 0.0
    %1074 = vmatpush1.xpose.msra.mxu0 0.0
    %1075 = vmatprep.subr.mxu0 0.0
    %1076 = vmatpush1.xpose.msra.mxu0 0.0
    %1077 = vmatprep.subr.mxu0 0.0
    %1078 = vmatpush1.xpose.msra.mxu0 0.0
    %1079 = vmatprep.subr.mxu0 0.0
    %1080 = vmatpush1.xpose.msra.mxu0 0.0
    %1081 = vmatprep.subr.mxu0 0.0
    %1082 = vmatpush1.xpose.msra.mxu0 0.0
    %1083 = vmatprep.subr.mxu0 0.0
    %1084 = vmatpush1.xpose.msra.mxu0 0.0
    %1085 = vmatprep.subr.mxu0 0.0
    %1086 = vmatpush1.xpose.msra.mxu0 0.0
    %1087 = vmatprep.subr.mxu0 0.0
    %1088 = vmatpush1.xpose.msra.mxu0 0.0
    %1089 = vmatprep.subr.mxu0 0.0
    %1090 = vmatpush1.xpose.msra.mxu0 0.0
    %1091 = vmatprep.subr.mxu0 0.0
    %1092 = vmatpush1.xpose.msra.mxu0 0.0
    %1093 = vmatprep.subr.mxu0 0.0
    %1094 = vmatpush1.xpose.msra.mxu0 0.0
    %1095 = vmatprep.subr.mxu0 0.0
    %1096 = vmatpush1.xpose.msra.mxu0 0.0
    %1097 = vmatprep.subr.mxu0 0.0
    %1098 = vmatpush1.xpose.msra.mxu0 0.0
    %1099 = vmatprep.subr.mxu0 0.0
    %1100 = vmatpush1.xpose.msra.mxu0 0.0
    %1101 = vmatprep.subr.mxu0 0.0
    %1102 = vmatpush1.xpose.msra.mxu0 0.0
    %1103 = vmatprep.subr.mxu0 0.0
    %1104 = vmatpush1.xpose.msra.mxu0 0.0
    %1105 = vmatprep.subr.mxu0 0.0
    %1106 = vmatpush1.xpose.msra.mxu0 0.0
    %1107 = vmatprep.subr.mxu0 0.0
    %1108 = vmatpush1.xpose.msra.mxu0 0.0
    %1109 = vmatprep.subr.mxu0 0.0
    %1110 = vmatpush1.xpose.msra.mxu0 0.0
    %1111 = vmatprep.subr.mxu0 0.0
    %1112 = vmatpush1.xpose.msra.mxu0 0.0
    %1113 = vmatprep.subr.mxu0 0.0
    %1114 = vmatpush1.xpose.msra.mxu0 0.0
    %1115 = vmatprep.subr.mxu0 0.0
    %1116 = vmatpush1.xpose.msra.mxu0 0.0
    %1117 = vmatprep.subr.mxu0 0.0
    %1118 = vmatpush1.xpose.msra.mxu0 0.0
    %1119 = vmatprep.subr.mxu0 0.0
    %1120 = vmatpush1.xpose.msra.mxu0 0.0
    %1121 = vmatprep.subr.mxu0 0.0
    %1122 = vmatpush1.xpose.msra.mxu0 0.0
    %1123 = vmatprep.subr.mxu0 0.0
    %1124 = vmatpush1.xpose.msra.mxu0 0.0
    %1125 = vmatprep.subr.mxu0 0.0
    %1126 = vmatpush1.xpose.msra.mxu0 0.0
    %1127 = vmatprep.subr.mxu0 0.0
    %1128 = vmatpush1.xpose.msra.mxu0 0.0
    %1129 = vmatprep.mubr.f32.mxu0 0.0
    %1130 = vmatmul.mubr.f32.gmra.mrb[0].mxu0 %v1061
    %v1131 = vpop.f32.mrb[0].mxu0
    %v1132 = vadd.f32 0.0, %v1131
    %v1133 = vpop.f32.mrb[0].mxu0
    %1134 = vdwg.mxu0
    %v1135 = vsel %vm153, %v1054, -inf
    %1136 = vmax.xlane.f32.xlu0 %v1135
    %v1137 = vpop.xlane.xlu0 %1136
    %v1138 = vsel %vm153, %v1132, -inf
    %1139 = vmax.xlane.f32.xlu0 %v1138
    %v1140 = vpop.xlane.xlu0 %1139
    %v1141 = vsub.f32 %v1054, %v1137
    %v1142 = vsub.f32 %v1132, %v1140
    %v1143 = vmul.f32 %v1141, 1.442695
    %v1144 = vpow.pop %v1143
    %v1145 = vmul.f32 %v1142, 1.442695
    %v1146 = vpow.pop %v1145
    %v1147 = vsel %vm153, %v1144, 0.0
    %1148 = vadd.xlane.f32.xlu0 %v1147
    %v1149 = vpop.xlane.xlu0 %1148
    %v1150 = vsel %vm153, %v1146, 0.0
    %1151 = vadd.xlane.f32.xlu0 %v1150
    %v1152 = vpop.xlane.xlu0 %1151
    %v1153 = vrcp.pop %v1149
    %v1154 = vrcp.pop %v1152
    %v1155 = vmul.f32 %v1144, %v1153
    %v1156 = vmul.f32 %v1146, %v1154
    %1157 = vrot.lane.b32.xlu0 %v142, 48
    %v1158 = vpop.permute.xlu0 %1157
    %v1161 = vsel %vm153, %v1155, 0
    %1163 = vmatprep.subr.mxu0 0.0
    %1164 = vmatpush1.msra.mxu0 %v1158
    %1165 = vmatprep.subr.mxu0 0.0
    %1166 = vmatpush1.msra.mxu0 0.0
    %1167 = vmatprep.subr.mxu0 0.0
    %1168 = vmatpush1.msra.mxu0 0.0
    %1169 = vmatprep.subr.mxu0 0.0
    %1170 = vmatpush1.msra.mxu0 0.0
    %1171 = vmatprep.subr.mxu0 0.0
    %1172 = vmatpush1.msra.mxu0 0.0
    %1173 = vmatprep.subr.mxu0 0.0
    %1174 = vmatpush1.msra.mxu0 0.0
    %1175 = vmatprep.subr.mxu0 0.0
    %1176 = vmatpush1.msra.mxu0 0.0
    %1177 = vmatprep.subr.mxu0 0.0
    %1178 = vmatpush1.msra.mxu0 0.0
    %1179 = vmatprep.subr.mxu0 0.0
    %1180 = vmatpush1.msra.mxu0 0.0
    %1181 = vmatprep.subr.mxu0 0.0
    %1182 = vmatpush1.msra.mxu0 0.0
    %1183 = vmatprep.subr.mxu0 0.0
    %1184 = vmatpush1.msra.mxu0 0.0
    %1185 = vmatprep.subr.mxu0 0.0
    %1186 = vmatpush1.msra.mxu0 0.0
    %1187 = vmatprep.subr.mxu0 0.0
    %1188 = vmatpush1.msra.mxu0 0.0
    %1189 = vmatprep.subr.mxu0 0.0
    %1190 = vmatpush1.msra.mxu0 0.0
    %1191 = vmatprep.subr.mxu0 0.0
    %1192 = vmatpush1.msra.mxu0 0.0
    %1193 = vmatprep.subr.mxu0 0.0
    %1194 = vmatpush1.msra.mxu0 0.0
    %1195 = vmatprep.subr.mxu0 0.0
    %1196 = vmatpush1.msra.mxu0 0.0
    %1197 = vmatprep.subr.mxu0 0.0
    %1198 = vmatpush1.msra.mxu0 0.0
    %1199 = vmatprep.subr.mxu0 0.0
    %1200 = vmatpush1.msra.mxu0 0.0
    %1201 = vmatprep.subr.mxu0 0.0
    %1202 = vmatpush1.msra.mxu0 0.0
    %1203 = vmatprep.subr.mxu0 0.0
    %1204 = vmatpush1.msra.mxu0 0.0
    %1205 = vmatprep.subr.mxu0 0.0
    %1206 = vmatpush1.msra.mxu0 0.0
    %1207 = vmatprep.subr.mxu0 0.0
    %1208 = vmatpush1.msra.mxu0 0.0
    %1209 = vmatprep.subr.mxu0 0.0
    %1210 = vmatpush1.msra.mxu0 0.0
    %1211 = vmatprep.subr.mxu0 0.0
    %1212 = vmatpush1.msra.mxu0 0.0
    %1213 = vmatprep.subr.mxu0 0.0
    %1214 = vmatpush1.msra.mxu0 0.0
    %1215 = vmatprep.subr.mxu0 0.0
    %1216 = vmatpush1.msra.mxu0 0.0
    %1217 = vmatprep.subr.mxu0 0.0
    %1218 = vmatpush1.msra.mxu0 0.0
    %1219 = vmatprep.subr.mxu0 0.0
    %1220 = vmatpush1.msra.mxu0 0.0
    %1221 = vmatprep.subr.mxu0 0.0
    %1222 = vmatpush1.msra.mxu0 0.0
    %1223 = vmatprep.subr.mxu0 0.0
    %1224 = vmatpush1.msra.mxu0 0.0
    %1225 = vmatprep.subr.mxu0 0.0
    %1226 = vmatpush1.msra.mxu0 0.0
    %1227 = vmatprep.mubr.f32.mxu0 0.0
    %1228 = vmatmul.mubr.f32.gmra.mrb[0].mxu0 %v1161
    %v1229 = vpop.f32.mrb[0].mxu0
    %v1230 = vadd.f32 0.0, %v1229
    %v1231 = vpop.f32.mrb[0].mxu0
    %1232 = vdwg.mxu0
    %1233 = vrot.lane.b32.xlu0 %v147, 48
    %v1234 = vpop.permute.xlu0 %1233
    %v1237 = vsel %vm153, %v1156, 0
    %1239 = vmatprep.subr.mxu0 0.0
    %1240 = vmatpush1.msra.mxu0 %v1234
    %1241 = vmatprep.subr.mxu0 0.0
    %1242 = vmatpush1.msra.mxu0 0.0
    %1243 = vmatprep.subr.mxu0 0.0
    %1244 = vmatpush1.msra.mxu0 0.0
    %1245 = vmatprep.subr.mxu0 0.0
    %1246 = vmatpush1.msra.mxu0 0.0
    %1247 = vmatprep.subr.mxu0 0.0
    %1248 = vmatpush1.msra.mxu0 0.0
    %1249 = vmatprep.subr.mxu0 0.0
    %1250 = vmatpush1.msra.mxu0 0.0
    %1251 = vmatprep.subr.mxu0 0.0
    %1252 = vmatpush1.msra.mxu0 0.0
    %1253 = vmatprep.subr.mxu0 0.0
    %1254 = vmatpush1.msra.mxu0 0.0
    %1255 = vmatprep.subr.mxu0 0.0
    %1256 = vmatpush1.msra.mxu0 0.0
    %1257 = vmatprep.subr.mxu0 0.0
    %1258 = vmatpush1.msra.mxu0 0.0
    %1259 = vmatprep.subr.mxu0 0.0
    %1260 = vmatpush1.msra.mxu0 0.0
    %1261 = vmatprep.subr.mxu0 0.0
    %1262 = vmatpush1.msra.mxu0 0.0
    %1263 = vmatprep.subr.mxu0 0.0
    %1264 = vmatpush1.msra.mxu0 0.0
    %1265 = vmatprep.subr.mxu0 0.0
    %1266 = vmatpush1.msra.mxu0 0.0
    %1267 = vmatprep.subr.mxu0 0.0
    %1268 = vmatpush1.msra.mxu0 0.0
    %1269 = vmatprep.subr.mxu0 0.0
    %1270 = vmatpush1.msra.mxu0 0.0
    %1271 = vmatprep.subr.mxu0 0.0
    %1272 = vmatpush1.msra.mxu0 0.0
    %1273 = vmatprep.subr.mxu0 0.0
    %1274 = vmatpush1.msra.mxu0 0.0
    %1275 = vmatprep.subr.mxu0 0.0
    %1276 = vmatpush1.msra.mxu0 0.0
    %1277 = vmatprep.subr.mxu0 0.0
    %1278 = vmatpush1.msra.mxu0 0.0
    %1279 = vmatprep.subr.mxu0 0.0
    %1280 = vmatpush1.msra.mxu0 0.0
    %1281 = vmatprep.subr.mxu0 0.0
    %1282 = vmatpush1.msra.mxu0 0.0
    %1283 = vmatprep.subr.mxu0 0.0
    %1284 = vmatpush1.msra.mxu0 0.0
    %1285 = vmatprep.subr.mxu0 0.0
    %1286 = vmatpush1.msra.mxu0 0.0
    %1287 = vmatprep.subr.mxu0 0.0
    %1288 = vmatpush1.msra.mxu0 0.0
    %1289 = vmatprep.subr.mxu0 0.0
    %1290 = vmatpush1.msra.mxu0 0.0
    %1291 = vmatprep.subr.mxu0 0.0
    %1292 = vmatpush1.msra.mxu0 0.0
    %1293 = vmatprep.subr.mxu0 0.0
    %1294 = vmatpush1.msra.mxu0 0.0
    %1295 = vmatprep.subr.mxu0 0.0
    %1296 = vmatpush1.msra.mxu0 0.0
    %1297 = vmatprep.subr.mxu0 0.0
    %1298 = vmatpush1.msra.mxu0 0.0
    %1299 = vmatprep.subr.mxu0 0.0
    %1300 = vmatpush1.msra.mxu0 0.0
    %1301 = vmatprep.subr.mxu0 0.0
    %1302 = vmatpush1.msra.mxu0 0.0
    %1303 = vmatprep.mubr.f32.mxu0 0.0
    %1304 = vmatmul.mubr.f32.gmra.mrb[0].mxu0 %v1237
    %v1305 = vpop.f32.mrb[0].mxu0
    %v1306 = vadd.f32 0.0, %v1305
    %v1307 = vpop.f32.mrb[0].mxu0
    %1308 = vdwg.mxu0
    %1310 = vrot.lane.b32.xlu0 %v24, 32
    %v1311 = vpop.permute.xlu0 %1310
    %v1314 = vsel %vm153, %v1230, 0
    %v1317 = vsel %vm153, %v1306, 0
    %1319 = vmatprep.subr.mxu0 0.0
    %1320 = vmatpush1.msra.mxu0 %v1311
    %1321 = vmatprep.subr.mxu0 0.0
    %1322 = vmatpush1.msra.mxu0 0.0
    %1323 = vmatprep.subr.mxu0 0.0
    %1324 = vmatpush1.msra.mxu0 0.0
    %1325 = vmatprep.subr.mxu0 0.0
    %1326 = vmatpush1.msra.mxu0 0.0
    %1327 = vmatprep.subr.mxu0 0.0
    %1328 = vmatpush1.msra.mxu0 0.0
    %1329 = vmatprep.subr.mxu0 0.0
    %1330 = vmatpush1.msra.mxu0 0.0
    %1331 = vmatprep.subr.mxu0 0.0
    %1332 = vmatpush1.msra.mxu0 0.0
    %1333 = vmatprep.subr.mxu0 0.0
    %1334 = vmatpush1.msra.mxu0 0.0
    %1335 = vmatprep.subr.mxu0 0.0
    %1336 = vmatpush1.msra.mxu0 0.0
    %1337 = vmatprep.subr.mxu0 0.0
    %1338 = vmatpush1.msra.mxu0 0.0
    %1339 = vmatprep.subr.mxu0 0.0
    %1340 = vmatpush1.msra.mxu0 0.0
    %1341 = vmatprep.subr.mxu0 0.0
    %1342 = vmatpush1.msra.mxu0 0.0
    %1343 = vmatprep.subr.mxu0 0.0
    %1344 = vmatpush1.msra.mxu0 0.0
    %1345 = vmatprep.subr.mxu0 0.0
    %1346 = vmatpush1.msra.mxu0 0.0
    %1347 = vmatprep.subr.mxu0 0.0
    %1348 = vmatpush1.msra.mxu0 0.0
    %1349 = vmatprep.subr.mxu0 0.0
    %1350 = vmatpush1.msra.mxu0 0.0
    %1351 = vmatprep.subr.mxu0 0.0
    %1352 = vmatpush1.msra.mxu0 0.0
    %1353 = vmatprep.subr.mxu0 0.0
    %1354 = vmatpush1.msra.mxu0 0.0
    %1355 = vmatprep.subr.mxu0 0.0
    %1356 = vmatpush1.msra.mxu0 0.0
    %1357 = vmatprep.subr.mxu0 0.0
    %1358 = vmatpush1.msra.mxu0 0.0
    %1359 = vmatprep.subr.mxu0 0.0
    %1360 = vmatpush1.msra.mxu0 0.0
    %1361 = vmatprep.subr.mxu0 0.0
    %1362 = vmatpush1.msra.mxu0 0.0
    %1363 = vmatprep.subr.mxu0 0.0
    %1364 = vmatpush1.msra.mxu0 0.0
    %1365 = vmatprep.subr.mxu0 0.0
    %1366 = vmatpush1.msra.mxu0 0.0
    %1367 = vmatprep.subr.mxu0 0.0
    %1368 = vmatpush1.msra.mxu0 0.0
    %1369 = vmatprep.subr.mxu0 0.0
    %1370 = vmatpush1.msra.mxu0 0.0
    %1371 = vmatprep.subr.mxu0 0.0
    %1372 = vmatpush1.msra.mxu0 0.0
    %1373 = vmatprep.subr.mxu0 0.0
    %1374 = vmatpush1.msra.mxu0 0.0
    %1375 = vmatprep.subr.mxu0 0.0
    %1376 = vmatpush1.msra.mxu0 0.0
    %1377 = vmatprep.subr.mxu0 0.0
    %1378 = vmatpush1.msra.mxu0 0.0
    %1379 = vmatprep.subr.mxu0 0.0
    %1380 = vmatpush1.msra.mxu0 0.0
    %1381 = vmatprep.subr.mxu0 0.0
    %1382 = vmatpush1.msra.mxu0 0.0
    %1383 = vmatprep.mubr.f32.mxu0 0.0
    %1384 = vmatmul.mubr.f32.gmra.mrb[0].mxu0 %v1314
    %v1385 = vpop.f32.mrb[0].mxu0
    %v1386 = vadd.f32 0.0, %v1385
    %v1387 = vpop.f32.mrb[0].mxu0
    %1388 = vmatprep.mubr.f32.mxu0 0.0
    %1389 = vmatmul.mubr.f32.gmra.mrb[0].mxu0 %v1317
    %v1390 = vpop.f32.mrb[0].mxu0
    %v1391 = vadd.f32 0.0, %v1390
    %v1392 = vpop.f32.mrb[0].mxu0
    %1393 = vdwg.mxu0
    %v1394 = vadd.f32 %v971, %v1386
    %v1395 = vadd.f32 %v976, %v1391
    %1396 = vrot.lane.b32.xlu0 %v142, 104
    %v1397 = vpop.permute.xlu0 %1396
    %1398 = vrot.lane.b32.xlu0 %v142, 72
    %v1399 = vpop.permute.xlu0 %1398
    %v1400 = vsel %vm153, %v1397, 0
    %v1402 = vsel %vm153, %v1399, 0
    %1404 = vmatprep.subr.mxu0 0.0
    %1405 = vmatpush1.xpose.msra.mxu0 %v1402
    %1406 = vmatprep.subr.mxu0 0.0
    %1407 = vmatpush1.xpose.msra.mxu0 0.0
    %1408 = vmatprep.subr.mxu0 0.0
    %1409 = vmatpush1.xpose.msra.mxu0 0.0
    %1410 = vmatprep.subr.mxu0 0.0
    %1411 = vmatpush1.xpose.msra.mxu0 0.0
    %1412 = vmatprep.subr.mxu0 0.0
    %1413 = vmatpush1.xpose.msra.mxu0 0.0
    %1414 = vmatprep.subr.mxu0 0.0
    %1415 = vmatpush1.xpose.msra.mxu0 0.0
    %1416 = vmatprep.subr.mxu0 0.0
    %1417 = vmatpush1.xpose.msra.mxu0 0.0
    %1418 = vmatprep.subr.mxu0 0.0
    %1419 = vmatpush1.xpose.msra.mxu0 0.0
    %1420 = vmatprep.subr.mxu0 0.0
    %1421 = vmatpush1.xpose.msra.mxu0 0.0
    %1422 = vmatprep.subr.mxu0 0.0
    %1423 = vmatpush1.xpose.msra.mxu0 0.0
    %1424 = vmatprep.subr.mxu0 0.0
    %1425 = vmatpush1.xpose.msra.mxu0 0.0
    %1426 = vmatprep.subr.mxu0 0.0
    %1427 = vmatpush1.xpose.msra.mxu0 0.0
    %1428 = vmatprep.subr.mxu0 0.0
    %1429 = vmatpush1.xpose.msra.mxu0 0.0
    %1430 = vmatprep.subr.mxu0 0.0
    %1431 = vmatpush1.xpose.msra.mxu0 0.0
    %1432 = vmatprep.subr.mxu0 0.0
    %1433 = vmatpush1.xpose.msra.mxu0 0.0
    %1434 = vmatprep.subr.mxu0 0.0
    %1435 = vmatpush1.xpose.msra.mxu0 0.0
    %1436 = vmatprep.subr.mxu0 0.0
    %1437 = vmatpush1.xpose.msra.mxu0 0.0
    %1438 = vmatprep.subr.mxu0 0.0
    %1439 = vmatpush1.xpose.msra.mxu0 0.0
    %1440 = vmatprep.subr.mxu0 0.0
    %1441 = vmatpush1.xpose.msra.mxu0 0.0
    %1442 = vmatprep.subr.mxu0 0.0
    %1443 = vmatpush1.xpose.msra.mxu0 0.0
    %1444 = vmatprep.subr.mxu0 0.0
    %1445 = vmatpush1.xpose.msra.mxu0 0.0
    %1446 = vmatprep.subr.mxu0 0.0
    %1447 = vmatpush1.xpose.msra.mxu0 0.0
    %1448 = vmatprep.subr.mxu0 0.0
    %1449 = vmatpush1.xpose.msra.mxu0 0.0
    %1450 = vmatprep.subr.mxu0 0.0
    %1451 = vmatpush1.xpose.msra.mxu0 0.0
    %1452 = vmatprep.subr.mxu0 0.0
    %1453 = vmatpush1.xpose.msra.mxu0 0.0
    %1454 = vmatprep.subr.mxu0 0.0
    %1455 = vmatpush1.xpose.msra.mxu0 0.0
    %1456 = vmatprep.subr.mxu0 0.0
    %1457 = vmatpush1.xpose.msra.mxu0 0.0
    %1458 = vmatprep.subr.mxu0 0.0
    %1459 = vmatpush1.xpose.msra.mxu0 0.0
    %1460 = vmatprep.subr.mxu0 0.0
    %1461 = vmatpush1.xpose.msra.mxu0 0.0
    %1462 = vmatprep.subr.mxu0 0.0
    %1463 = vmatpush1.xpose.msra.mxu0 0.0
    %1464 = vmatprep.subr.mxu0 0.0
    %1465 = vmatpush1.xpose.msra.mxu0 0.0
    %1466 = vmatprep.subr.mxu0 0.0
    %1467 = vmatpush1.xpose.msra.mxu0 0.0
    %1468 = vmatprep.mubr.f32.mxu0 0.0
    %1469 = vmatmul.mubr.f32.gmra.mrb[0].mxu0 %v1400
    %v1470 = vpop.f32.mrb[0].mxu0
    %v1471 = vadd.f32 0.0, %v1470
    %v1472 = vpop.f32.mrb[0].mxu0
    %1473 = vdwg.mxu0
    %1474 = vrot.lane.b32.xlu0 %v147, 104
    %v1475 = vpop.permute.xlu0 %1474
    %1476 = vrot.lane.b32.xlu0 %v147, 72
    %v1477 = vpop.permute.xlu0 %1476
    %v1478 = vsel %vm153, %v1475, 0
    %v1480 = vsel %vm153, %v1477, 0
    %1482 = vmatprep.subr.mxu0 0.0
    %1483 = vmatpush1.xpose.msra.mxu0 %v1480
    %1484 = vmatprep.subr.mxu0 0.0
    %1485 = vmatpush1.xpose.msra.mxu0 0.0
    %1486 = vmatprep.subr.mxu0 0.0
    %1487 = vmatpush1.xpose.msra.mxu0 0.0
    %1488 = vmatprep.subr.mxu0 0.0
    %1489 = vmatpush1.xpose.msra.mxu0 0.0
    %1490 = vmatprep.subr.mxu0 0.0
    %1491 = vmatpush1.xpose.msra.mxu0 0.0
    %1492 = vmatprep.subr.mxu0 0.0
    %1493 = vmatpush1.xpose.msra.mxu0 0.0
    %1494 = vmatprep.subr.mxu0 0.0
    %1495 = vmatpush1.xpose.msra.mxu0 0.0
    %1496 = vmatprep.subr.mxu0 0.0
    %1497 = vmatpush1.xpose.msra.mxu0 0.0
    %1498 = vmatprep.subr.mxu0 0.0
    %1499 = vmatpush1.xpose.msra.mxu0 0.0
    %1500 = vmatprep.subr.mxu0 0.0
    %1501 = vmatpush1.xpose.msra.mxu0 0.0
    %1502 = vmatprep.subr.mxu0 0.0
    %1503 = vmatpush1.xpose.msra.mxu0 0.0
    %1504 = vmatprep.subr.mxu0 0.0
    %1505 = vmatpush1.xpose.msra.mxu0 0.0
    %1506 = vmatprep.subr.mxu0 0.0
    %1507 = vmatpush1.xpose.msra.mxu0 0.0
    %1508 = vmatprep.subr.mxu0 0.0
    %1509 = vmatpush1.xpose.msra.mxu0 0.0
    %1510 = vmatprep.subr.mxu0 0.0
    %1511 = vmatpush1.xpose.msra.mxu0 0.0
    %1512 = vmatprep.subr.mxu0 0.0
    %1513 = vmatpush1.xpose.msra.mxu0 0.0
    %1514 = vmatprep.subr.mxu0 0.0
    %1515 = vmatpush1.xpose.msra.mxu0 0.0
    %1516 = vmatprep.subr.mxu0 0.0
    %1517 = vmatpush1.xpose.msra.mxu0 0.0
    %1518 = vmatprep.subr.mxu0 0.0
    %1519 = vmatpush1.xpose.msra.mxu0 0.0
    %1520 = vmatprep.subr.mxu0 0.0
    %1521 = vmatpush1.xpose.msra.mxu0 0.0
    %1522 = vmatprep.subr.mxu0 0.0
    %1523 = vmatpush1.xpose.msra.mxu0 0.0
    %1524 = vmatprep.subr.mxu0 0.0
    %1525 = vmatpush1.xpose.msra.mxu0 0.0
    %1526 = vmatprep.subr.mxu0 0.0
    %1527 = vmatpush1.xpose.msra.mxu0 0.0
    %1528 = vmatprep.subr.mxu0 0.0
    %1529 = vmatpush1.xpose.msra.mxu0 0.0
    %1530 = vmatprep.subr.mxu0 0.0
    %1531 = vmatpush1.xpose.msra.mxu0 0.0
    %1532 = vmatprep.subr.mxu0 0.0
    %1533 = vmatpush1.xpose.msra.mxu0 0.0
    %1534 = vmatprep.subr.mxu0 0.0
    %1535 = vmatpush1.xpose.msra.mxu0 0.0
    %1536 = vmatprep.subr.mxu0 0.0
    %1537 = vmatpush1.xpose.msra.mxu0 0.0
    %1538 = vmatprep.subr.mxu0 0.0
    %1539 = vmatpush1.xpose.msra.mxu0 0.0
    %1540 = vmatprep.subr.mxu0 0.0
    %1541 = vmatpush1.xpose.msra.mxu0 0.0
    %1542 = vmatprep.subr.mxu0 0.0
    %1543 = vmatpush1.xpose.msra.mxu0 0.0
    %1544 = vmatprep.subr.mxu0 0.0
    %1545 = vmatpush1.xpose.msra.mxu0 0.0
    %1546 = vmatprep.mubr.f32.mxu0 0.0
    %1547 = vmatmul.mubr.f32.gmra.mrb[0].mxu0 %v1478
    %v1548 = vpop.f32.mrb[0].mxu0
    %v1549 = vadd.f32 0.0, %v1548
    %v1550 = vpop.f32.mrb[0].mxu0
    %1551 = vdwg.mxu0
    %v1552 = vsel %vm153, %v1471, -inf
    %1553 = vmax.xlane.f32.xlu0 %v1552
    %v1554 = vpop.xlane.xlu0 %1553
    %v1555 = vsel %vm153, %v1549, -inf
    %1556 = vmax.xlane.f32.xlu0 %v1555
    %v1557 = vpop.xlane.xlu0 %1556
    %v1558 = vsub.f32 %v1471, %v1554
    %v1559 = vsub.f32 %v1549, %v1557
    %v1560 = vmul.f32 %v1558, 1.442695
    %v1561 = vpow.pop %v1560
    %v1562 = vmul.f32 %v1559, 1.442695
    %v1563 = vpow.pop %v1562
    %v1564 = vsel %vm153, %v1561, 0.0
    %1565 = vadd.xlane.f32.xlu0 %v1564
    %v1566 = vpop.xlane.xlu0 %1565
    %v1567 = vsel %vm153, %v1563, 0.0
    %1568 = vadd.xlane.f32.xlu0 %v1567
    %v1569 = vpop.xlane.xlu0 %1568
    %v1570 = vrcp.pop %v1566
    %v1571 = vrcp.pop %v1569
    %v1572 = vmul.f32 %v1561, %v1570
    %v1573 = vmul.f32 %v1563, %v1571
    %1574 = vrot.lane.b32.xlu0 %v142, 40
    %v1575 = vpop.permute.xlu0 %1574
    %v1578 = vsel %vm153, %v1572, 0
    %1580 = vmatprep.subr.mxu0 0.0
    %1581 = vmatpush1.msra.mxu0 %v1575
    %1582 = vmatprep.subr.mxu0 0.0
    %1583 = vmatpush1.msra.mxu0 0.0
    %1584 = vmatprep.subr.mxu0 0.0
    %1585 = vmatpush1.msra.mxu0 0.0
    %1586 = vmatprep.subr.mxu0 0.0
    %1587 = vmatpush1.msra.mxu0 0.0
    %1588 = vmatprep.subr.mxu0 0.0
    %1589 = vmatpush1.msra.mxu0 0.0
    %1590 = vmatprep.subr.mxu0 0.0
    %1591 = vmatpush1.msra.mxu0 0.0
    %1592 = vmatprep.subr.mxu0 0.0
    %1593 = vmatpush1.msra.mxu0 0.0
    %1594 = vmatprep.subr.mxu0 0.0
    %1595 = vmatpush1.msra.mxu0 0.0
    %1596 = vmatprep.subr.mxu0 0.0
    %1597 = vmatpush1.msra.mxu0 0.0
    %1598 = vmatprep.subr.mxu0 0.0
    %1599 = vmatpush1.msra.mxu0 0.0
    %1600 = vmatprep.subr.mxu0 0.0
    %1601 = vmatpush1.msra.mxu0 0.0
    %1602 = vmatprep.subr.mxu0 0.0
    %1603 = vmatpush1.msra.mxu0 0.0
    %1604 = vmatprep.subr.mxu0 0.0
    %1605 = vmatpush1.msra.mxu0 0.0
    %1606 = vmatprep.subr.mxu0 0.0
    %1607 = vmatpush1.msra.mxu0 0.0
    %1608 = vmatprep.subr.mxu0 0.0
    %1609 = vmatpush1.msra.mxu0 0.0
    %1610 = vmatprep.subr.mxu0 0.0
    %1611 = vmatpush1.msra.mxu0 0.0
    %1612 = vmatprep.subr.mxu0 0.0
    %1613 = vmatpush1.msra.mxu0 0.0
    %1614 = vmatprep.subr.mxu0 0.0
    %1615 = vmatpush1.msra.mxu0 0.0
    %1616 = vmatprep.subr.mxu0 0.0
    %1617 = vmatpush1.msra.mxu0 0.0
    %1618 = vmatprep.subr.mxu0 0.0
    %1619 = vmatpush1.msra.mxu0 0.0
    %1620 = vmatprep.subr.mxu0 0.0
    %1621 = vmatpush1.msra.mxu0 0.0
    %1622 = vmatprep.subr.mxu0 0.0
    %1623 = vmatpush1.msra.mxu0 0.0
    %1624 = vmatprep.subr.mxu0 0.0
    %1625 = vmatpush1.msra.mxu0 0.0
    %1626 = vmatprep.subr.mxu0 0.0
    %1627 = vmatpush1.msra.mxu0 0.0
    %1628 = vmatprep.subr.mxu0 0.0
    %1629 = vmatpush1.msra.mxu0 0.0
    %1630 = vmatprep.subr.mxu0 0.0
    %1631 = vmatpush1.msra.mxu0 0.0
    %1632 = vmatprep.subr.mxu0 0.0
    %1633 = vmatpush1.msra.mxu0 0.0
    %1634 = vmatprep.subr.mxu0 0.0
    %1635 = vmatpush1.msra.mxu0 0.0
    %1636 = vmatprep.subr.mxu0 0.0
    %1637 = vmatpush1.msra.mxu0 0.0
    %1638 = vmatprep.subr.mxu0 0.0
    %1639 = vmatpush1.msra.mxu0 0.0
    %1640 = vmatprep.subr.mxu0 0.0
    %1641 = vmatpush1.msra.mxu0 0.0
    %1642 = vmatprep.subr.mxu0 0.0
    %1643 = vmatpush1.msra.mxu0 0.0
    %1644 = vmatprep.mubr.f32.mxu0 0.0
    %1645 = vmatmul.mubr.f32.gmra.mrb[0].mxu0 %v1578
    %v1646 = vpop.f32.mrb[0].mxu0
    %v1647 = vadd.f32 0.0, %v1646
    %v1648 = vpop.f32.mrb[0].mxu0
    %1649 = vdwg.mxu0
    %1650 = vrot.lane.b32.xlu0 %v147, 40
    %v1651 = vpop.permute.xlu0 %1650
    %v1654 = vsel %vm153, %v1573, 0
    %1656 = vmatprep.subr.mxu0 0.0
    %1657 = vmatpush1.msra.mxu0 %v1651
    %1658 = vmatprep.subr.mxu0 0.0
    %1659 = vmatpush1.msra.mxu0 0.0
    %1660 = vmatprep.subr.mxu0 0.0
    %1661 = vmatpush1.msra.mxu0 0.0
    %1662 = vmatprep.subr.mxu0 0.0
    %1663 = vmatpush1.msra.mxu0 0.0
    %1664 = vmatprep.subr.mxu0 0.0
    %1665 = vmatpush1.msra.mxu0 0.0
    %1666 = vmatprep.subr.mxu0 0.0
    %1667 = vmatpush1.msra.mxu0 0.0
    %1668 = vmatprep.subr.mxu0 0.0
    %1669 = vmatpush1.msra.mxu0 0.0
    %1670 = vmatprep.subr.mxu0 0.0
    %1671 = vmatpush1.msra.mxu0 0.0
    %1672 = vmatprep.subr.mxu0 0.0
    %1673 = vmatpush1.msra.mxu0 0.0
    %1674 = vmatprep.subr.mxu0 0.0
    %1675 = vmatpush1.msra.mxu0 0.0
    %1676 = vmatprep.subr.mxu0 0.0
    %1677 = vmatpush1.msra.mxu0 0.0
    %1678 = vmatprep.subr.mxu0 0.0
    %1679 = vmatpush1.msra.mxu0 0.0
    %1680 = vmatprep.subr.mxu0 0.0
    %1681 = vmatpush1.msra.mxu0 0.0
    %1682 = vmatprep.subr.mxu0 0.0
    %1683 = vmatpush1.msra.mxu0 0.0
    %1684 = vmatprep.subr.mxu0 0.0
    %1685 = vmatpush1.msra.mxu0 0.0
    %1686 = vmatprep.subr.mxu0 0.0
    %1687 = vmatpush1.msra.mxu0 0.0
    %1688 = vmatprep.subr.mxu0 0.0
    %1689 = vmatpush1.msra.mxu0 0.0
    %1690 = vmatprep.subr.mxu0 0.0
    %1691 = vmatpush1.msra.mxu0 0.0
    %1692 = vmatprep.subr.mxu0 0.0
    %1693 = vmatpush1.msra.mxu0 0.0
    %1694 = vmatprep.subr.mxu0 0.0
    %1695 = vmatpush1.msra.mxu0 0.0
    %1696 = vmatprep.subr.mxu0 0.0
    %1697 = vmatpush1.msra.mxu0 0.0
    %1698 = vmatprep.subr.mxu0 0.0
    %1699 = vmatpush1.msra.mxu0 0.0
    %1700 = vmatprep.subr.mxu0 0.0
    %1701 = vmatpush1.msra.mxu0 0.0
    %1702 = vmatprep.subr.mxu0 0.0
    %1703 = vmatpush1.msra.mxu0 0.0
    %1704 = vmatprep.subr.mxu0 0.0
    %1705 = vmatpush1.msra.mxu0 0.0
    %1706 = vmatprep.subr.mxu0 0.0
    %1707 = vmatpush1.msra.mxu0 0.0
    %1708 = vmatprep.subr.mxu0 0.0
    %1709 = vmatpush1.msra.mxu0 0.0
    %1710 = vmatprep.subr.mxu0 0.0
    %1711 = vmatpush1.msra.mxu0 0.0
    %1712 = vmatprep.subr.mxu0 0.0
    %1713 = vmatpush1.msra.mxu0 0.0
    %1714 = vmatprep.subr.mxu0 0.0
    %1715 = vmatpush1.msra.mxu0 0.0
    %1716 = vmatprep.subr.mxu0 0.0
    %1717 = vmatpush1.msra.mxu0 0.0
    %1718 = vmatprep.subr.mxu0 0.0
    %1719 = vmatpush1.msra.mxu0 0.0
    %1720 = vmatprep.mubr.f32.mxu0 0.0
    %1721 = vmatmul.mubr.f32.gmra.mrb[0].mxu0 %v1654
    %v1722 = vpop.f32.mrb[0].mxu0
    %v1723 = vadd.f32 0.0, %v1722
    %v1724 = vpop.f32.mrb[0].mxu0
    %1725 = vdwg.mxu0
    %1727 = vrot.lane.b32.xlu0 %v26, 32
    %v1728 = vpop.permute.xlu0 %1727
    %v1731 = vsel %vm153, %v1647, 0
    %v1734 = vsel %vm153, %v1723, 0
    %1736 = vmatprep.subr.mxu0 0.0
    %1737 = vmatpush1.msra.mxu0 %v1728
    %1738 = vmatprep.subr.mxu0 0.0
    %1739 = vmatpush1.msra.mxu0 0.0
    %1740 = vmatprep.subr.mxu0 0.0
    %1741 = vmatpush1.msra.mxu0 0.0
    %1742 = vmatprep.subr.mxu0 0.0
    %1743 = vmatpush1.msra.mxu0 0.0
    %1744 = vmatprep.subr.mxu0 0.0
    %1745 = vmatpush1.msra.mxu0 0.0
    %1746 = vmatprep.subr.mxu0 0.0
    %1747 = vmatpush1.msra.mxu0 0.0
    %1748 = vmatprep.subr.mxu0 0.0
    %1749 = vmatpush1.msra.mxu0 0.0
    %1750 = vmatprep.subr.mxu0 0.0
    %1751 = vmatpush1.msra.mxu0 0.0
    %1752 = vmatprep.subr.mxu0 0.0
    %1753 = vmatpush1.msra.mxu0 0.0
    %1754 = vmatprep.subr.mxu0 0.0
    %1755 = vmatpush1.msra.mxu0 0.0
    %1756 = vmatprep.subr.mxu0 0.0
    %1757 = vmatpush1.msra.mxu0 0.0
    %1758 = vmatprep.subr.mxu0 0.0
    %1759 = vmatpush1.msra.mxu0 0.0
    %1760 = vmatprep.subr.mxu0 0.0
    %1761 = vmatpush1.msra.mxu0 0.0
    %1762 = vmatprep.subr.mxu0 0.0
    %1763 = vmatpush1.msra.mxu0 0.0
    %1764 = vmatprep.subr.mxu0 0.0
    %1765 = vmatpush1.msra.mxu0 0.0
    %1766 = vmatprep.subr.mxu0 0.0
    %1767 = vmatpush1.msra.mxu0 0.0
    %1768 = vmatprep.subr.mxu0 0.0
    %1769 = vmatpush1.msra.mxu0 0.0
    %1770 = vmatprep.subr.mxu0 0.0
    %1771 = vmatpush1.msra.mxu0 0.0
    %1772 = vmatprep.subr.mxu0 0.0
    %1773 = vmatpush1.msra.mxu0 0.0
    %1774 = vmatprep.subr.mxu0 0.0
    %1775 = vmatpush1.msra.mxu0 0.0
    %1776 = vmatprep.subr.mxu0 0.0
    %1777 = vmatpush1.msra.mxu0 0.0
    %1778 = vmatprep.subr.mxu0 0.0
    %1779 = vmatpush1.msra.mxu0 0.0
    %1780 = vmatprep.subr.mxu0 0.0
    %1781 = vmatpush1.msra.mxu0 0.0
    %1782 = vmatprep.subr.mxu0 0.0
    %1783 = vmatpush1.msra.mxu0 0.0
    %1784 = vmatprep.subr.mxu0 0.0
    %1785 = vmatpush1.msra.mxu0 0.0
    %1786 = vmatprep.subr.mxu0 0.0
    %1787 = vmatpush1.msra.mxu0 0.0
    %1788 = vmatprep.subr.mxu0 0.0
    %1789 = vmatpush1.msra.mxu0 0.0
    %1790 = vmatprep.subr.mxu0 0.0
    %1791 = vmatpush1.msra.mxu0 0.0
    %1792 = vmatprep.subr.mxu0 0.0
    %1793 = vmatpush1.msra.mxu0 0.0
    %1794 = vmatprep.subr.mxu0 0.0
    %1795 = vmatpush1.msra.mxu0 0.0
    %1796 = vmatprep.subr.mxu0 0.0
    %1797 = vmatpush1.msra.mxu0 0.0
    %1798 = vmatprep.subr.mxu0 0.0
    %1799 = vmatpush1.msra.mxu0 0.0
    %1800 = vmatprep.mubr.f32.mxu0 0.0
    %1801 = vmatmul.mubr.f32.gmra.mrb[0].mxu0 %v1731
    %v1802 = vpop.f32.mrb[0].mxu0
    %v1803 = vadd.f32 0.0, %v1802
    %v1804 = vpop.f32.mrb[0].mxu0
    %1805 = vmatprep.mubr.f32.mxu0 0.0
    %1806 = vmatmul.mubr.f32.gmra.mrb[0].mxu0 %v1734
    %v1807 = vpop.f32.mrb[0].mxu0
    %v1808 = vadd.f32 0.0, %v1807
    %v1809 = vpop.f32.mrb[0].mxu0
    %1810 = vdwg.mxu0
    %v1811 = vadd.f32 %v1394, %v1803
    %v1812 = vadd.f32 %v1395, %v1808
    %v1813 = vadd.f32 %v18, %v1811
    %v1814 = vadd.f32 %v19, %v1812
    %v1815 = vlaneseq
    %v1816 = vshrl.u32 %v1815, 7
    %v1817 = vsub.s32 1, %v1816
    %v1818 = vrot.slane %v36, %v1817
    %v1819 = vadd.f32 %v1813, %v1818
    %v1820 = vadd.f32 %v1814, %v1818
    %v1821 = vsel %vm37, %v1819, 0.0
    %1822 = vadd.xlane.f32.xlu0 %v1821
    %v1823 = vpop.xlane.xlu0 %1822
    %v1824 = vsel %vm37, %v1820, 0.0
    %1825 = vadd.xlane.f32.xlu0 %v1824
    %v1826 = vpop.xlane.xlu0 %1825
    %v1827 = vmul.f32 %v1823, %v44
    %v1828 = vmul.f32 %v1826, %v44
    %v1829 = vsub.f32 %v1819, %v1827
    %v1830 = vsub.f32 %v1820, %v1828
    %v1831 = vmul.f32 %v1829, %v1829
    %v1832 = vmul.f32 %v1830, %v1830
    %v1833 = vsel %vm37, %v1831, 0.0
    %1834 = vadd.xlane.f32.xlu0 %v1833
    %v1835 = vpop.xlane.xlu0 %1834
    %v1836 = vsel %vm37, %v1832, 0.0
    %1837 = vadd.xlane.f32.xlu0 %v1836
    %v1838 = vpop.xlane.xlu0 %1837
    %v1839 = vmul.f32 %v1835, %v44
    %v1840 = vmul.f32 %v1838, %v44
    %v1841 = vadd.f32 %v1839, 1e-05
    %v1842 = vadd.f32 %v1840, 1e-05
    %v1843 = vrsqrt.pop %v1841
    %v1844 = vrsqrt.pop %v1842
    %v1845 = vmul.f32 %v1829, %v1843
    %v1846 = vmul.f32 %v1830, %v1844
    %v1847 = vlaneseq
    %v1848 = vshrl.u32 %v1847, 7
    %v1849 = vsub.s32 2, %v1848
    %v1850 = vrot.slane %v36, %v1849
    %v1852 = vsel %vm37, %v1845, 0
    %v1855 = vsel %vm37, %v1846, 0
    %1857 = vmatprep.subr.mxu0 0.0
    %1858 = vmatpush1.msra.mxu0 %v21
    %1859 = vmatprep.subr.mxu0 0.0
    %1860 = vmatpush1.msra.mxu0 %v23
    %1861 = vmatprep.subr.mxu0 0.0
    %1862 = vmatpush1.msra.mxu0 %v25
    %1863 = vmatprep.subr.mxu0 0.0
    %1864 = vmatpush1.msra.mxu0 %v27
    %1865 = vmatprep.subr.mxu0 0.0
    %1866 = vmatpush1.msra.mxu0 0.0
    %1867 = vmatprep.subr.mxu0 0.0
    %1868 = vmatpush1.msra.mxu0 0.0
    %1869 = vmatprep.subr.mxu0 0.0
    %1870 = vmatpush1.msra.mxu0 0.0
    %1871 = vmatprep.subr.mxu0 0.0
    %1872 = vmatpush1.msra.mxu0 0.0
    %1873 = vmatprep.subr.mxu0 0.0
    %1874 = vmatpush1.msra.mxu0 0.0
    %1875 = vmatprep.subr.mxu0 0.0
    %1876 = vmatpush1.msra.mxu0 0.0
    %1877 = vmatprep.subr.mxu0 0.0
    %1878 = vmatpush1.msra.mxu0 0.0
    %1879 = vmatprep.subr.mxu0 0.0
    %1880 = vmatpush1.msra.mxu0 0.0
    %1881 = vmatprep.subr.mxu0 0.0
    %1882 = vmatpush1.msra.mxu0 0.0
    %1883 = vmatprep.subr.mxu0 0.0
    %1884 = vmatpush1.msra.mxu0 0.0
    %1885 = vmatprep.subr.mxu0 0.0
    %1886 = vmatpush1.msra.mxu0 0.0
    %1887 = vmatprep.subr.mxu0 0.0
    %1888 = vmatpush1.msra.mxu0 0.0
    %1889 = vmatprep.subr.mxu0 0.0
    %1890 = vmatpush1.msra.mxu0 0.0
    %1891 = vmatprep.subr.mxu0 0.0
    %1892 = vmatpush1.msra.mxu0 0.0
    %1893 = vmatprep.subr.mxu0 0.0
    %1894 = vmatpush1.msra.mxu0 0.0
    %1895 = vmatprep.subr.mxu0 0.0
    %1896 = vmatpush1.msra.mxu0 0.0
    %1897 = vmatprep.subr.mxu0 0.0
    %1898 = vmatpush1.msra.mxu0 0.0
    %1899 = vmatprep.subr.mxu0 0.0
    %1900 = vmatpush1.msra.mxu0 0.0
    %1901 = vmatprep.subr.mxu0 0.0
    %1902 = vmatpush1.msra.mxu0 0.0
    %1903 = vmatprep.subr.mxu0 0.0
    %1904 = vmatpush1.msra.mxu0 0.0
    %1905 = vmatprep.subr.mxu0 0.0
    %1906 = vmatpush1.msra.mxu0 0.0
    %1907 = vmatprep.subr.mxu0 0.0
    %1908 = vmatpush1.msra.mxu0 0.0
    %1909 = vmatprep.subr.mxu0 0.0
    %1910 = vmatpush1.msra.mxu0 0.0
    %1911 = vmatprep.subr.mxu0 0.0
    %1912 = vmatpush1.msra.mxu0 0.0
    %1913 = vmatprep.subr.mxu0 0.0
    %1914 = vmatpush1.msra.mxu0 0.0
    %1915 = vmatprep.subr.mxu0 0.0
    %1916 = vmatpush1.msra.mxu0 0.0
    %1917 = vmatprep.subr.mxu0 0.0
    %1918 = vmatpush1.msra.mxu0 0.0
    %1919 = vmatprep.subr.mxu0 0.0
    %1920 = vmatpush1.msra.mxu0 0.0
    %1921 = vmatprep.mubr.f32.mxu0 0.0
    %1922 = vmatmul.mubr.f32.gmra.mrb[0].mxu0 %v1852
    %v1923 = vpop.f32.mrb[0].mxu0
    %v1924 = vadd.f32 %v1850, %v1923
    %v1925 = vpop.f32.mrb[0].mxu0
    %1926 = vmatprep.mubr.f32.mxu0 0.0
    %1927 = vmatmul.mubr.f32.gmra.mrb[0].mxu0 %v1855
    %v1928 = vpop.f32.mrb[0].mxu0
    %v1929 = vadd.f32 %v1850, %v1928
    %v1930 = vpop.f32.mrb[0].mxu0
    %1931 = vdwg.mxu0
    %v1932 = vmul.f32 %v1924, 0.5
    %v1933 = vmul.f32 %v1929, 0.5
    %v1934 = vmul.f32 %v1924, 0.70710677
    %v1935 = vmul.f32 %v1929, 0.70710677
    %v1936 = verf.f32.pop %v1934
    %v1937 = verf.f32.pop %v1935
    %v1938 = vadd.f32 %v1936, 1.0
    %v1939 = vadd.f32 %v1937, 1.0
    %v1940 = vmul.f32 %v1932, %v1938
    %v1941 = vmul.f32 %v1933, %v1939
    %vm1942 = vcmask 523264
    %v1944 = vsel %vm1942, %v1940, 0
    %v1947 = vsel %vm1942, %v1941, 0
    %1949 = vmatprep.subr.mxu0 0.0
    %1950 = vmatpush1.msra.mxu0 %v28
    %1951 = vmatprep.subr.mxu0 0.0
    %1952 = vmatpush1.msra.mxu0 %v29
    %1953 = vmatprep.subr.mxu0 0.0
    %1954 = vmatpush1.msra.mxu0 %v30
    %1955 = vmatprep.subr.mxu0 0.0
    %1956 = vmatpush1.msra.mxu0 %v31
    %1957 = vmatprep.subr.mxu0 0.0
    %1958 = vmatpush1.msra.mxu0 %v32
    %1959 = vmatprep.subr.mxu0 0.0
    %1960 = vmatpush1.msra.mxu0 %v33
    %1961 = vmatprep.subr.mxu0 0.0
    %1962 = vmatpush1.msra.mxu0 %v34
    %1963 = vmatprep.subr.mxu0 0.0
    %1964 = vmatpush1.msra.mxu0 %v35
    %1965 = vmatprep.subr.mxu0 0.0
    %1966 = vmatpush1.msra.mxu0 0.0
    %1967 = vmatprep.subr.mxu0 0.0
    %1968 = vmatpush1.msra.mxu0 0.0
    %1969 = vmatprep.subr.mxu0 0.0
    %1970 = vmatpush1.msra.mxu0 0.0
    %1971 = vmatprep.subr.mxu0 0.0
    %1972 = vmatpush1.msra.mxu0 0.0
    %1973 = vmatprep.subr.mxu0 0.0
    %1974 = vmatpush1.msra.mxu0 0.0
    %1975 = vmatprep.subr.mxu0 0.0
    %1976 = vmatpush1.msra.mxu0 0.0
    %1977 = vmatprep.subr.mxu0 0.0
    %1978 = vmatpush1.msra.mxu0 0.0
    %1979 = vmatprep.subr.mxu0 0.0
    %1980 = vmatpush1.msra.mxu0 0.0
    %1981 = vmatprep.subr.mxu0 0.0
    %1982 = vmatpush1.msra.mxu0 0.0
    %1983 = vmatprep.subr.mxu0 0.0
    %1984 = vmatpush1.msra.mxu0 0.0
    %1985 = vmatprep.subr.mxu0 0.0
    %1986 = vmatpush1.msra.mxu0 0.0
    %1987 = vmatprep.subr.mxu0 0.0
    %1988 = vmatpush1.msra.mxu0 0.0
    %1989 = vmatprep.subr.mxu0 0.0
    %1990 = vmatpush1.msra.mxu0 0.0
    %1991 = vmatprep.subr.mxu0 0.0
    %1992 = vmatpush1.msra.mxu0 0.0
    %1993 = vmatprep.subr.mxu0 0.0
    %1994 = vmatpush1.msra.mxu0 0.0
    %1995 = vmatprep.subr.mxu0 0.0
    %1996 = vmatpush1.msra.mxu0 0.0
    %1997 = vmatprep.subr.mxu0 0.0
    %1998 = vmatpush1.msra.mxu0 0.0
    %1999 = vmatprep.subr.mxu0 0.0
    %2000 = vmatpush1.msra.mxu0 0.0
    %2001 = vmatprep.subr.mxu0 0.0
    %2002 = vmatpush1.msra.mxu0 0.0
    %2003 = vmatprep.subr.mxu0 0.0
    %2004 = vmatpush1.msra.mxu0 0.0
    %2005 = vmatprep.subr.mxu0 0.0
    %2006 = vmatpush1.msra.mxu0 0.0
    %2007 = vmatprep.subr.mxu0 0.0
    %2008 = vmatpush1.msra.mxu0 0.0
    %2009 = vmatprep.subr.mxu0 0.0
    %2010 = vmatpush1.msra.mxu0 0.0
    %2011 = vmatprep.subr.mxu0 0.0
    %2012 = vmatpush1.msra.mxu0 0.0
    %2013 = vmatprep.mubr.f32.mxu0 0.0
    %2014 = vmatmul.mubr.f32.gmra.mrb[0].mxu0 %v1944
    %v2015 = vpop.f32.mrb[0].mxu0
    %v2016 = vadd.f32 0.0, %v2015
    %v2017 = vpop.f32.mrb[0].mxu0
    %2018 = vmatprep.mubr.f32.mxu0 0.0
    %2019 = vmatmul.mubr.f32.gmra.mrb[0].mxu0 %v1947
    %v2020 = vpop.f32.mrb[0].mxu0
    %v2021 = vadd.f32 0.0, %v2020
    %v2022 = vpop.f32.mrb[0].mxu0
    %2023 = vdwg.mxu0
    %v2024 = vadd.f32 %v1819, %v2016
    %v2025 = vadd.f32 %v1820, %v2021
    %v2026 = vlaneseq
    %v2027 = vshrl.u32 %v2026, 7
    %v2028 = vsub.s32 3, %v2027
    %v2029 = vrot.slane %v36, %v2028
    %v2030 = vadd.f32 %v2024, %v2029
    %v2031 = vadd.f32 %v2025, %v2029
    %2032 = vst.msk [vmem:[#allocation2] sm:$0xff] %vm37, %v2030
    %2033 = vst.msk [vmem:[#allocation2 + $0x8] sm:$0xff] %vm37, %v2031
    // Predicated region
    $region18: #{tpu_custom_call.1} parent=1 // pred_check
      _
    $region19: #{tpu_custom_call.1} parent=1 // pred_check_branch
      %2035 = sbr.rel (0) target = $region21
    $region20: #{tpu_custom_call.1} parent=1 // pred_region
      %s2037 = ssub.s32 256, 256
      %2038 = vsyncadd [#allocation3], %s2037
      %s2039 = sshll.u32 [#allocation2], 4
      %s2040 = int_to_ptr.vmem [resolvable:$true] %s2039
      %2045 = dma.vmem_to_hbm [thread:$0]  %s2040, 256, %s4, [#allocation3], 128, 128, 8
    $region21: #{tpu_custom_call.1} parent=1 // pred_fallthru
      _
    // Predicated region
    $region22: #{tpu_custom_call.1} parent=1 // pred_check
      _
    $region23: #{tpu_custom_call.1} parent=1 // pred_check_branch
      %2047 = sbr.rel (0) target = $region25
    $region24: #{tpu_custom_call.1} parent=1 // pred_region
      %2048 = dma.done [#allocation3], 256
    $region25: #{tpu_custom_call.1} parent=1 // pred_fallthru
      _
    %2049 = vsyncpa [#allocation3], 1

</llo_original>
